<compile_context>
chip_gen: v6e
topology: v6e:2x2x1
jax: 0.10.0
libtpu: 0.0.40
codegen_flags: <defaults>
</compile_context>

<pallas_src>
import jax
import jax.numpy as jnp
from jax.experimental import pallas as pl
from jax.experimental.pallas import tpu as pltpu


# ----------------------------- Pallas kernels ------------------------------ #

def _gemm_silu_kernel(w_ref, p_ref, b_ref, o_ref):
    """Fused (folded) SeparableConvBlock:  o = SiLU(W @ P + b).

    w_ref: (Cout, K)  bf16 folded dw*pw*bn weights
    p_ref: (K, TM)    f32 im2col patches (cast to bf16 on the MXU path)
    b_ref: (Cout, 1)  f32 folded bias
    o_ref: (Cout, TM) lane-dense output
    """
    y = jnp.dot(w_ref[...], p_ref[...].astype(jnp.bfloat16),
                preferred_element_type=jnp.float32)
    y = y + b_ref[...]
    # SiLU: divide goes to the EUP slot alongside the exp.
    o_ref[...] = (y * pl.reciprocal(1.0 + jnp.exp(-y), approx=True)).astype(o_ref.dtype)


def _gemm_bias_kernel(w_ref, p_ref, b_ref, o_ref):
    """Plain 3x3-conv GEMM head:  o = W @ P + b  (no residual DMA)."""
    y = jnp.dot(w_ref[...], p_ref[...].astype(jnp.bfloat16),
                preferred_element_type=jnp.float32)
    o_ref[...] = (y + b_ref[...]).astype(o_ref.dtype)


def _iter_step_kernel(w_ref, p_ref, feat_ref, rot_ref, o_ref):
    """One refinement step:  o = rot + feat_contrib + W_rot @ P_rot.

    feat_ref holds the (loop-invariant) feature-channel contribution of the
    iterative conv, bias included.  rot_ref is aliased with o_ref so the
    rotation tensor is accumulated in place.
    """
    y = jnp.dot(w_ref[...], p_ref[...].astype(jnp.bfloat16),
                preferred_element_type=jnp.float32)
    o_ref[...] = (rot_ref[...] + feat_ref[...] + y).astype(o_ref.dtype)


# ------------------------------- wrappers ---------------------------------- #

# Raises v5e's 16 MiB scoped-VMEM default, matches the v6e/v7x default and is
# well within v7x's 64 MiB physical VMEM.  Working set here is < 1 MiB.
_VMEM_LIMIT = 32 * 1024 * 1024


def _pick_tm(m):
    """Largest row tile (multiple of 128) that still leaves >=2 grid steps."""
    assert m % 128 == 0, "N*H*W must be a multiple of 128"
    for cand in (1024, 512, 256):
        if m % cand == 0 and m // cand >= 2:
            return cand
    for cand in (1024, 512, 256, 128):
        if m % cand == 0:
            return cand
    return 128


def _im2col_cfirst(x_cm, n, h, w):
    """(C, N*H*W) -> (9*C, N*H*W): 3x3 / pad=1 taps, tap-major K ordering.

    Pure data-layout glue in XLA; all arithmetic runs inside Pallas.
    """
    c = x_cm.shape[0]
    x4 = x_cm.reshape(c, n, h, w)
    xp = jnp.pad(x4, ((0, 0), (0, 0), (1, 1), (1, 1)))
    taps = [xp[:, :, dy:dy + h, dx:dx + w] for dy in range(3) for dx in range(3)]
    return jnp.concatenate(taps, axis=0).reshape(9 * c, n * h * w)


def _col_gemm(kernel, w, patches, col_args, out_dtype, aliases=None):
    """Run `kernel` as a column-tiled GEMM producing a (Cout, M) output.

    w:        (Cout, K)      resident weight block
    patches:  (K, M)         lane-tiled right-hand side
    col_args: list of (Cout, 1) broadcast or (Cout, M) per-tile operands
    """
    cout, k = w.shape
    k2, m = patches.shape
    assert k == k2
    tm = _pick_tm(m)

    in_specs = [
        pl.BlockSpec((cout, k), lambda i: (0, 0)),
        pl.BlockSpec((k, tm), lambda i: (0, i)),
    ]
    args = [w, patches]
    for a in col_args:
        if a.shape[1] == 1:
            in_specs.append(pl.BlockSpec((cout, 1), lambda i: (0, 0)))
        else:
            in_specs.append(pl.BlockSpec((cout, tm), lambda i: (0, i)))
        args.append(a)

    return pl.pallas_call(
        kernel,
        out_shape=jax.ShapeDtypeStruct((cout, m), out_dtype),
        grid=(m // tm,),
        in_specs=in_specs,
        out_specs=pl.BlockSpec((cout, tm), lambda i: (0, i)),
        input_output_aliases=aliases or {},
        compiler_params=pltpu.CompilerParams(
            dimension_semantics=("parallel",),
            vmem_limit_bytes=_VMEM_LIMIT),
    )(*args)


def rotation_net_forward(x_nchw, params, num_iteration_steps, num_values):
    """Forward pass matching RotationNet.forward (PyTorch NCHW input)."""
    n, c, h, w = x_nchw.shape
    m = n * h * w
    # NCHW -> channels-first lane-dense (C, M)
    feats = jnp.transpose(x_nchw, (1, 0, 2, 3)).reshape(c, m)

    # SeparableConvBlock stack: each block is one fused GEMM + SiLU kernel.
    for blk in params["blocks"]:
        patches = _im2col_cfirst(feats, n, h, w)
        feats = _col_gemm(_gemm_silu_kernel, blk["w_eff"], patches,
                          [blk["b_eff"]], jnp.float32)

    # Heads: im2col of the (now frozen) features is shared by the initial
    # conv and by the hoisted feature-half of the iterative conv.
    patches_feat = _im2col_cfirst(feats, n, h, w)
    rotation = _col_gemm(_gemm_bias_kernel, params["init_w"], patches_feat,
                         [params["init_b"]], jnp.float32)
    feat_contrib = _col_gemm(_gemm_bias_kernel, params["iter_w_feat"],
                             patches_feat, [params["iter_b"]], jnp.float32)

    for _ in range(num_iteration_steps):
        patches_rot = _im2col_cfirst(rotation, n, h, w)
        # rotation <- rotation + (iter_conv(cat[features, rotation]))
        rotation = _col_gemm(_iter_step_kernel, params["iter_w_rot"],
                             patches_rot, [feat_contrib, rotation],
                             jnp.float32, aliases={3: 0})

    ca = rotation.shape[0]
    # PyTorch: rotation.permute(0,2,3,1).view(N, -1, num_values)
    return rotation.reshape(ca, n, h, w).transpose(1, 2, 3, 0).reshape(
        n, -1, num_values)


# ----------------------------- parameters ---------------------------------- #

def init_raw_params(key, in_channels, num_values, num_anchors, depth, width):
    """Random parameters in (PyTorch-like) per-layer shapes."""
    ca = num_anchors * num_values

    def nrm(k, shape, s):
        return s * jax.random.normal(k, shape, jnp.float32)

    blocks = []
    for i in range(depth):
        cin = in_channels if i == 0 else width
        key, *ks = jax.random.split(key, 9)
        blocks.append(dict(
            dw_w=nrm(ks[0], (cin, 3, 3), 1.0 / 3.0),      # depthwise (cin,1,3,3)
            dw_b=nrm(ks[1], (cin,), 0.1),
            pw_w=nrm(ks[2], (width, cin), float(cin) ** -0.5),
            pw_b=nrm(ks[3], (width,), 0.1),
            gamma=1.0 + nrm(ks[4], (width,), 0.1),
            beta=nrm(ks[5], (width,), 0.1),
            mean=nrm(ks[6], (width,), 0.1),
            var=1.0 + jnp.abs(nrm(ks[7], (width,), 0.1)),
        ))

    key, k1, k2, k3, k4 = jax.random.split(key, 5)
    return dict(
        blocks=blocks,
        init_w=nrm(k1, (ca, width, 3, 3), float(9 * width) ** -0.5),
        init_b=nrm(k2, (ca,), 0.1),
        iter_w=nrm(k3, (ca, width + ca, 3, 3), float(9 * (width + ca)) ** -0.5),
        iter_b=nrm(k4, (ca,), 0.1),
    )


def prepare_params(raw, eps=1e-4):
    """One-time algebraic folding + layout prep (would run at weight load)."""
    blocks = []
    for b in raw["blocks"]:
        cin = b["dw_w"].shape[0]
        cout = b["pw_w"].shape[0]
        scale = b["gamma"] / jnp.sqrt(b["var"] + eps)              # (cout,)
        shift = b["beta"] - b["mean"] * scale
        dw = b["dw_w"].reshape(cin, 9)                             # (c, tap)
        # W_eff[co, tap, c] = pw[co, c] * dw[c, tap] * scale[co]
        w3 = b["pw_w"][:, None, :] * dw.T[None, :, :]              # (cout, 9, cin)
        w_eff = (w3 * scale[:, None, None]).reshape(cout, 9 * cin)
        b_eff = (b["pw_w"] @ b["dw_b"] + b["pw_b"]) * scale + shift
        blocks.append(dict(w_eff=w_eff.astype(jnp.bfloat16),
                           b_eff=b_eff.reshape(cout, 1)))

    def conv_w(wt):  # (cout, cin, 3, 3) -> (cout, 9*cin), tap-major K
        return wt.transpose(0, 2, 3, 1).reshape(wt.shape[0], -1)

    ca, width = raw["init_w"].shape[0], raw["init_w"].shape[1]
    iw = raw["iter_w"].transpose(0, 2, 3, 1)                       # (ca,3,3,width+ca)
    return dict(
        blocks=blocks,
        init_w=conv_w(raw["init_w"]).astype(jnp.bfloat16),
        init_b=raw["init_b"].reshape(ca, 1),
        iter_w_feat=iw[..., :width].reshape(ca, 9 * width).astype(jnp.bfloat16),
        iter_w_rot=iw[..., width:].reshape(ca, 9 * ca).astype(jnp.bfloat16),
        iter_b=raw["iter_b"].reshape(ca, 1),
    )


# ---------------------------------- main ------------------------------------ #

if __name__ == "__main__":
    in_channels, num_values, num_anchors = 4, 4, 2
    depth, width, num_iteration_steps = 2, 16, 2
    N, H, W = 2, 16, 16

    key = jax.random.PRNGKey(0)
    pkey, xkey = jax.random.split(key)
    raw = init_raw_params(pkey, in_channels, num_values, num_anchors, depth, width)
    params = prepare_params(raw)
    x = jax.random.normal(xkey, (N, in_channels, H, W), jnp.float32)   # NCHW

    fwd = jax.jit(rotation_net_forward, static_argnums=(2, 3))
    out = jax.block_until_ready(fwd(x, params, num_iteration_steps, num_values))

    expected = (N, H * W * num_anchors, num_values)
    assert out.shape == expected, (out.shape, expected)
    assert bool(jnp.all(jnp.isfinite(out)))
    print("KERNEL_OK")
</pallas_src>

<mosaic_0001>
module attributes {stable_mosaic.version = 11 : i64} {
  func.func @_gemm_silu_kernel(%arg0: i32, %arg1: memref<16x36xbf16, #tpu.memory_space<vmem>>, %arg2: memref<36x256xf32, #tpu.memory_space<vmem>>, %arg3: memref<16x1xf32, #tpu.memory_space<vmem>>, %arg4: memref<16x256xf32, #tpu.memory_space<vmem>>) attributes {dimension_semantics = [#tpu.dimension_semantics<parallel>], iteration_bounds = array<i64: 2>, scalar_prefetch = 0 : i64, scratch_operands = 0 : i64, tpu.core_type = #tpu.core_type<tc>, window_params = [{pipeline_mode = #tpu.pipeline_mode<synchronous>, transform_indices = @transform_0, window_bounds = array<i64: 16, 36>}, {transform_indices = @transform_1, window_bounds = array<i64: 36, 256>}, {pipeline_mode = #tpu.pipeline_mode<synchronous>, transform_indices = @transform_2, window_bounds = array<i64: 16, 1>}, {transform_indices = @transform_3, window_bounds = array<i64: 16, 256>}]} {
    %c0 = arith.constant 0 : index
    %c0_0 = arith.constant 0 : index
    %0 = vector.load %arg1[%c0, %c0_0] : memref<16x36xbf16, #tpu.memory_space<vmem>>, vector<16x36xbf16>
    %c0_1 = arith.constant 0 : index
    %c0_2 = arith.constant 0 : index
    %1 = vector.load %arg2[%c0_1, %c0_2] : memref<36x256xf32, #tpu.memory_space<vmem>>, vector<36x256xf32>
    %2 = arith.truncf %1 : vector<36x256xf32> to vector<36x256xbf16>
    %cst = arith.constant dense<0.000000e+00> : vector<16x256xf32>
    %3 = tpu.matmul %0, %2, %cst {dimension_numbers = #tpu.dot_dimension_numbers<[1], [0], [0], [1], [0, 0, 1, 1], [], []>} : vector<16x36xbf16>, vector<36x256xbf16>, vector<16x256xf32> -> vector<16x256xf32>
    %c0_3 = arith.constant 0 : index
    %c0_4 = arith.constant 0 : index
    %4 = vector.load %arg3[%c0_3, %c0_4] : memref<16x1xf32, #tpu.memory_space<vmem>>, vector<16x1xf32>
    %5 = vector.broadcast %4 : vector<16x1xf32> to vector<16x256xf32>
    %6 = arith.addf %3, %5 : vector<16x256xf32>
    %cst_5 = arith.constant 0.000000e+00 : f32
    %7 = vector.broadcast %cst_5 : f32 to vector<16x256xf32>
    %8 = arith.subf %7, %6 : vector<16x256xf32>
    %9 = math.exp %8 : vector<16x256xf32>
    %cst_6 = arith.constant 1.000000e+00 : f32
    %10 = vector.broadcast %cst_6 : f32 to vector<16x256xf32>
    %11 = arith.addf %10, %9 : vector<16x256xf32>
    %12 = tpu.reciprocal %11 {approx = true} : vector<16x256xf32> -> vector<16x256xf32>
    %13 = arith.mulf %6, %12 : vector<16x256xf32>
    %c0_7 = arith.constant 0 : index
    %c0_8 = arith.constant 0 : index
    %14 = vector.load %arg4[%c0_7, %c0_8] : memref<16x256xf32, #tpu.memory_space<vmem>>, vector<16x256xf32>
    tpu.vector_store %arg4[%c0_7, %c0_8], %13 {strides = array<i32>} : memref<16x256xf32, #tpu.memory_space<vmem>>, vector<16x256xf32>,
    return
  }
  func.func @transform_0(%arg0: i32) -> (i32, i32) {
    %c0_i32 = arith.constant 0 : i32
    %c0_i32_0 = arith.constant 0 : i32
    %c0_i32_1 = arith.constant 0 : i32
    return %c0_i32, %c0_i32_0 : i32, i32
  }
  func.func @transform_1(%arg0: i32) -> (i32, i32) {
    %c0_i32 = arith.constant 0 : i32
    %c0_i32_0 = arith.constant 0 : i32
    return %c0_i32, %arg0 : i32, i32
  }
  func.func @transform_2(%arg0: i32) -> (i32, i32) {
    %c0_i32 = arith.constant 0 : i32
    %c0_i32_0 = arith.constant 0 : i32
    %c0_i32_1 = arith.constant 0 : i32
    return %c0_i32, %c0_i32_0 : i32, i32
  }
  func.func @transform_3(%arg0: i32) -> (i32, i32) {
    %c0_i32 = arith.constant 0 : i32
    %c0_i32_0 = arith.constant 0 : i32
    return %c0_i32, %arg0 : i32, i32
  }
}

module attributes {stable_mosaic.version = 11 : i64} {
  func.func @_gemm_silu_kernel(%arg0: i32, %arg1: memref<16x144xbf16, #tpu.memory_space<vmem>>, %arg2: memref<144x256xf32, #tpu.memory_space<vmem>>, %arg3: memref<16x1xf32, #tpu.memory_space<vmem>>, %arg4: memref<16x256xf32, #tpu.memory_space<vmem>>) attributes {dimension_semantics = [#tpu.dimension_semantics<parallel>], iteration_bounds = array<i64: 2>, scalar_prefetch = 0 : i64, scratch_operands = 0 : i64, tpu.core_type = #tpu.core_type<tc>, window_params = [{pipeline_mode = #tpu.pipeline_mode<synchronous>, transform_indices = @transform_0, window_bounds = array<i64: 16, 144>}, {transform_indices = @transform_1, window_bounds = array<i64: 144, 256>}, {pipeline_mode = #tpu.pipeline_mode<synchronous>, transform_indices = @transform_2, window_bounds = array<i64: 16, 1>}, {transform_indices = @transform_3, window_bounds = array<i64: 16, 256>}]} {
    %c0 = arith.constant 0 : index
    %c0_0 = arith.constant 0 : index
    %0 = vector.load %arg1[%c0, %c0_0] : memref<16x144xbf16, #tpu.memory_space<vmem>>, vector<16x144xbf16>
    %c0_1 = arith.constant 0 : index
    %c0_2 = arith.constant 0 : index
    %1 = vector.load %arg2[%c0_1, %c0_2] : memref<144x256xf32, #tpu.memory_space<vmem>>, vector<144x256xf32>
    %2 = arith.truncf %1 : vector<144x256xf32> to vector<144x256xbf16>
    %cst = arith.constant dense<0.000000e+00> : vector<16x256xf32>
    %3 = tpu.matmul %0, %2, %cst {dimension_numbers = #tpu.dot_dimension_numbers<[1], [0], [0], [1], [0, 0, 1, 1], [], []>} : vector<16x144xbf16>, vector<144x256xbf16>, vector<16x256xf32> -> vector<16x256xf32>
    %c0_3 = arith.constant 0 : index
    %c0_4 = arith.constant 0 : index
    %4 = vector.load %arg3[%c0_3, %c0_4] : memref<16x1xf32, #tpu.memory_space<vmem>>, vector<16x1xf32>
    %5 = vector.broadcast %4 : vector<16x1xf32> to vector<16x256xf32>
    %6 = arith.addf %3, %5 : vector<16x256xf32>
    %cst_5 = arith.constant 0.000000e+00 : f32
    %7 = vector.broadcast %cst_5 : f32 to vector<16x256xf32>
    %8 = arith.subf %7, %6 : vector<16x256xf32>
    %9 = math.exp %8 : vector<16x256xf32>
    %cst_6 = arith.constant 1.000000e+00 : f32
    %10 = vector.broadcast %cst_6 : f32 to vector<16x256xf32>
    %11 = arith.addf %10, %9 : vector<16x256xf32>
    %12 = tpu.reciprocal %11 {approx = true} : vector<16x256xf32> -> vector<16x256xf32>
    %13 = arith.mulf %6, %12 : vector<16x256xf32>
    %c0_7 = arith.constant 0 : index
    %c0_8 = arith.constant 0 : index
    %14 = vector.load %arg4[%c0_7, %c0_8] : memref<16x256xf32, #tpu.memory_space<vmem>>, vector<16x256xf32>
    tpu.vector_store %arg4[%c0_7, %c0_8], %13 {strides = array<i32>} : memref<16x256xf32, #tpu.memory_space<vmem>>, vector<16x256xf32>,
    return
  }
  func.func @transform_0(%arg0: i32) -> (i32, i32) {
    %c0_i32 = arith.constant 0 : i32
    %c0_i32_0 = arith.constant 0 : i32
    %c0_i32_1 = arith.constant 0 : i32
    return %c0_i32, %c0_i32_0 : i32, i32
  }
  func.func @transform_1(%arg0: i32) -> (i32, i32) {
    %c0_i32 = arith.constant 0 : i32
    %c0_i32_0 = arith.constant 0 : i32
    return %c0_i32, %arg0 : i32, i32
  }
  func.func @transform_2(%arg0: i32) -> (i32, i32) {
    %c0_i32 = arith.constant 0 : i32
    %c0_i32_0 = arith.constant 0 : i32
    %c0_i32_1 = arith.constant 0 : i32
    return %c0_i32, %c0_i32_0 : i32, i32
  }
  func.func @transform_3(%arg0: i32) -> (i32, i32) {
    %c0_i32 = arith.constant 0 : i32
    %c0_i32_0 = arith.constant 0 : i32
    return %c0_i32, %arg0 : i32, i32
  }
}

module attributes {stable_mosaic.version = 11 : i64} {
  func.func @_gemm_bias_kernel(%arg0: i32, %arg1: memref<8x144xbf16, #tpu.memory_space<vmem>>, %arg2: memref<144x256xf32, #tpu.memory_space<vmem>>, %arg3: memref<8x1xf32, #tpu.memory_space<vmem>>, %arg4: memref<8x256xf32, #tpu.memory_space<vmem>>) attributes {dimension_semantics = [#tpu.dimension_semantics<parallel>], iteration_bounds = array<i64: 2>, scalar_prefetch = 0 : i64, scratch_operands = 0 : i64, tpu.core_type = #tpu.core_type<tc>, window_params = [{pipeline_mode = #tpu.pipeline_mode<synchronous>, transform_indices = @transform_0, window_bounds = array<i64: 8, 144>}, {transform_indices = @transform_1, window_bounds = array<i64: 144, 256>}, {pipeline_mode = #tpu.pipeline_mode<synchronous>, transform_indices = @transform_2, window_bounds = array<i64: 8, 1>}, {transform_indices = @transform_3, window_bounds = array<i64: 8, 256>}]} {
    %c0 = arith.constant 0 : index
    %c0_0 = arith.constant 0 : index
    %0 = vector.load %arg1[%c0, %c0_0] : memref<8x144xbf16, #tpu.memory_space<vmem>>, vector<8x144xbf16>
    %c0_1 = arith.constant 0 : index
    %c0_2 = arith.constant 0 : index
    %1 = vector.load %arg2[%c0_1, %c0_2] : memref<144x256xf32, #tpu.memory_space<vmem>>, vector<144x256xf32>
    %2 = arith.truncf %1 : vector<144x256xf32> to vector<144x256xbf16>
    %cst = arith.constant dense<0.000000e+00> : vector<8x256xf32>
    %3 = tpu.matmul %0, %2, %cst {dimension_numbers = #tpu.dot_dimension_numbers<[1], [0], [0], [1], [0, 0, 1, 1], [], []>} : vector<8x144xbf16>, vector<144x256xbf16>, vector<8x256xf32> -> vector<8x256xf32>
    %c0_3 = arith.constant 0 : index
    %c0_4 = arith.constant 0 : index
    %4 = vector.load %arg3[%c0_3, %c0_4] : memref<8x1xf32, #tpu.memory_space<vmem>>, vector<8x1xf32>
    %5 = vector.broadcast %4 : vector<8x1xf32> to vector<8x256xf32>
    %6 = arith.addf %3, %5 : vector<8x256xf32>
    %c0_5 = arith.constant 0 : index
    %c0_6 = arith.constant 0 : index
    %7 = vector.load %arg4[%c0_5, %c0_6] : memref<8x256xf32, #tpu.memory_space<vmem>>, vector<8x256xf32>
    tpu.vector_store %arg4[%c0_5, %c0_6], %6 {strides = array<i32>} : memref<8x256xf32, #tpu.memory_space<vmem>>, vector<8x256xf32>,
    return
  }
  func.func @transform_0(%arg0: i32) -> (i32, i32) {
    %c0_i32 = arith.constant 0 : i32
    %c0_i32_0 = arith.constant 0 : i32
    %c0_i32_1 = arith.constant 0 : i32
    return %c0_i32, %c0_i32_0 : i32, i32
  }
  func.func @transform_1(%arg0: i32) -> (i32, i32) {
    %c0_i32 = arith.constant 0 : i32
    %c0_i32_0 = arith.constant 0 : i32
    return %c0_i32, %arg0 : i32, i32
  }
  func.func @transform_2(%arg0: i32) -> (i32, i32) {
    %c0_i32 = arith.constant 0 : i32
    %c0_i32_0 = arith.constant 0 : i32
    %c0_i32_1 = arith.constant 0 : i32
    return %c0_i32, %c0_i32_0 : i32, i32
  }
  func.func @transform_3(%arg0: i32) -> (i32, i32) {
    %c0_i32 = arith.constant 0 : i32
    %c0_i32_0 = arith.constant 0 : i32
    return %c0_i32, %arg0 : i32, i32
  }
}

module attributes {stable_mosaic.version = 11 : i64} {
  func.func @_iter_step_kernel(%arg0: i32, %arg1: memref<8x72xbf16, #tpu.memory_space<vmem>>, %arg2: memref<72x256xf32, #tpu.memory_space<vmem>>, %arg3: memref<8x256xf32, #tpu.memory_space<vmem>>, %arg4: memref<8x256xf32, #tpu.memory_space<vmem>>, %arg5: memref<8x256xf32, #tpu.memory_space<vmem>>) attributes {dimension_semantics = [#tpu.dimension_semantics<parallel>], iteration_bounds = array<i64: 2>, scalar_prefetch = 0 : i64, scratch_operands = 0 : i64, tpu.core_type = #tpu.core_type<tc>, window_params = [{pipeline_mode = #tpu.pipeline_mode<synchronous>, transform_indices = @transform_0, window_bounds = array<i64: 8, 72>}, {transform_indices = @transform_1, window_bounds = array<i64: 72, 256>}, {transform_indices = @transform_2, window_bounds = array<i64: 8, 256>}, {transform_indices = @transform_3, window_bounds = array<i64: 8, 256>}, {transform_indices = @transform_4, window_bounds = array<i64: 8, 256>}]} {
    %c0 = arith.constant 0 : index
    %c0_0 = arith.constant 0 : index
    %0 = vector.load %arg1[%c0, %c0_0] : memref<8x72xbf16, #tpu.memory_space<vmem>>, vector<8x72xbf16>
    %c0_1 = arith.constant 0 : index
    %c0_2 = arith.constant 0 : index
    %1 = vector.load %arg2[%c0_1, %c0_2] : memref<72x256xf32, #tpu.memory_space<vmem>>, vector<72x256xf32>
    %2 = arith.truncf %1 : vector<72x256xf32> to vector<72x256xbf16>
    %cst = arith.constant dense<0.000000e+00> : vector<8x256xf32>
    %3 = tpu.matmul %0, %2, %cst {dimension_numbers = #tpu.dot_dimension_numbers<[1], [0], [0], [1], [0, 0, 1, 1], [], []>} : vector<8x72xbf16>, vector<72x256xbf16>, vector<8x256xf32> -> vector<8x256xf32>
    %c0_3 = arith.constant 0 : index
    %c0_4 = arith.constant 0 : index
    %4 = vector.load %arg4[%c0_3, %c0_4] : memref<8x256xf32, #tpu.memory_space<vmem>>, vector<8x256xf32>
    %c0_5 = arith.constant 0 : index
    %c0_6 = arith.constant 0 : index
    %5 = vector.load %arg3[%c0_5, %c0_6] : memref<8x256xf32, #tpu.memory_space<vmem>>, vector<8x256xf32>
    %6 = arith.addf %4, %5 : vector<8x256xf32>
    %7 = arith.addf %6, %3 : vector<8x256xf32>
    %c0_7 = arith.constant 0 : index
    %c0_8 = arith.constant 0 : index
    %8 = vector.load %arg5[%c0_7, %c0_8] : memref<8x256xf32, #tpu.memory_space<vmem>>, vector<8x256xf32>
    tpu.vector_store %arg5[%c0_7, %c0_8], %7 {strides = array<i32>} : memref<8x256xf32, #tpu.memory_space<vmem>>, vector<8x256xf32>,
    return
  }
  func.func @transform_0(%arg0: i32) -> (i32, i32) {
    %c0_i32 = arith.constant 0 : i32
    %c0_i32_0 = arith.constant 0 : i32
    %c0_i32_1 = arith.constant 0 : i32
    return %c0_i32, %c0_i32_0 : i32, i32
  }
  func.func @transform_1(%arg0: i32) -> (i32, i32) {
    %c0_i32 = arith.constant 0 : i32
    %c0_i32_0 = arith.constant 0 : i32
    return %c0_i32, %arg0 : i32, i32
  }
  func.func @transform_2(%arg0: i32) -> (i32, i32) {
    %c0_i32 = arith.constant 0 : i32
    %c0_i32_0 = arith.constant 0 : i32
    return %c0_i32, %arg0 : i32, i32
  }
  func.func @transform_3(%arg0: i32) -> (i32, i32) {
    %c0_i32 = arith.constant 0 : i32
    %c0_i32_0 = arith.constant 0 : i32
    return %c0_i32, %arg0 : i32, i32
  }
  func.func @transform_4(%arg0: i32) -> (i32, i32) {
    %c0_i32 = arith.constant 0 : i32
    %c0_i32_0 = arith.constant 0 : i32
    return %c0_i32, %arg0 : i32, i32
  }
}

</mosaic_0001>

<llo_original>
// kernel: rotation_net_forward.6
$region0: #{rotation_net_forward.6}
  #allocation0 [shape = 'u32[]', space=smem, size = 0x4, offset = 0x4, fixed_abs, tag = 'smem constant byte address 0x4 - core index']
  #allocation1 [shape = 'u32[144,128]{1,0:T(1,128)}', space=vmem, size = 0x12000, scoped, tag = 'internal scratch']
  %s0 = inlined_call_operand.vmem [shape: bf16[16,36], index: 0, kind: input, shape index: {}]
  %s1 = inlined_call_operand.vmem [shape: f32[36,512], index: 1, kind: input, shape index: {}]
  %s2 = inlined_call_operand.vmem [shape: f32[16,1], index: 2, kind: input, shape index: {}]
  %s3 = inlined_call_operand.vmem [shape: f32[16,512], index: 3, kind: output, shape index: {}]
  %s4 = sld [smem:[#allocation0]]
  $region87: #{rotation_net_forward.6} parent=0
    _
  %s6 = ssub.s32 1, %s4
  %s7 = scalar_select 0, %s6, %s4
  $region1: #{rotation_net_forward.6} parent=0
    #allocation2 [shape = 'u8[81920]{0}', space=vmem, size = 0x14000, scoped, tag = 'input window, operand 1']
    #allocation3 [shape = 'u8[32768]{0}', space=vmem, size = 0x8000, scoped, tag = 'output window, operand 0']
    loop: start=0, step=1, limit=4
    $region2: #{rotation_net_forward.6} parent=1 // loop_pre_header
      _
    $region3: #{rotation_net_forward.6} parent=1 // loop_header
      %s9 = sphi 0, %s13
      %p10 = scmp.ge.s32.totalorder %s9, 4
      %s17 = sphi 0, %s17
      %s19 = sphi 0, %s17
      %s20 = sphi 0, %s19
      %s34 = sphi 0, %s20
      %s40 = sphi 0, %s42
      %s43 = sphi 0, %s40
      %s44 = sphi 0, %s43
      %s60 = sphi 0, %s44
      %s64 = sphi 0, %s64
      %s66 = sphi 0, %s64
      %s67 = sphi 0, %s66
      %s81 = sphi 0, %s67
      %s87 = sphi 0, %s89
      %s90 = sphi 0, %s87
      %s91 = sphi 0, %s90
      %s107 = sphi 0, %s91
    $region4: #{rotation_net_forward.6} parent=1 // loop_header_branch
      %12 = sbr.rel (%p10) target = $region8
    $region5: #{rotation_net_forward.6} parent=1 // loop_body
      %s14 = ssub.s32 %s9, 1
      %s15 = ssub.s32 %s9, 2
      %s16 = sadd.s32 %s9, 1
      %s18 = sadd.s32 %s17, 1
      %p21 = scmp.eq.s32.totalorder %s9, 1
      %p22 = scmp.ne.s32.totalorder %s17, %s19
      %p23 = scmp.eq.s32.totalorder %s9, 0
      %p24 = por %p22, %p23
      %p25 = scmp.ne.s32.totalorder %s17, %s19
      %p26 = scmp.eq.s32.totalorder %s14, 1
      %p27 = por %p25, %p26
      %p28 = scmp.ne.s32.totalorder %s19, %s20
      %p29 = scmp.eq.s32.totalorder %s14, 0
      %p30 = por %p28, %p29
      %p31 = scmp.ne.s32.totalorder %s19, %s20
      %p32 = scmp.eq.s32.totalorder %s15, 1
      %p33 = por %p31, %p32
      %p35 = scmp.ne.s32.totalorder %s20, %s34
      %p36 = scmp.eq.s32.totalorder %s15, 0
      %p37 = por %p35, %p36
      %s38 = ssub.s32 %s9, %s16
      %p39 = scmp.eq.s32.totalorder %s38, 0
      %s41 = sadd.s32 %s40, 1
      %s42 = scalar_select %p39, %s40, %s41
      %p45 = pneg %p39
      %p46 = scmp.eq.s32.totalorder %s9, 1
      %p47 = por %p45, %p46
      %p48 = scmp.ne.s32.totalorder %s40, %s43
      %p49 = scmp.eq.s32.totalorder %s9, 0
      %p50 = por %p48, %p49
      %p51 = scmp.ne.s32.totalorder %s40, %s43
      %p52 = scmp.eq.s32.totalorder %s14, 1
      %p53 = por %p51, %p52
      %p54 = scmp.ne.s32.totalorder %s43, %s44
      %p55 = scmp.eq.s32.totalorder %s14, 0
      %p56 = por %p54, %p55
      %p57 = scmp.ne.s32.totalorder %s43, %s44
      %p58 = scmp.eq.s32.totalorder %s15, 1
      %p59 = por %p57, %p58
      %p61 = scmp.ne.s32.totalorder %s44, %s60
      %p62 = scmp.eq.s32.totalorder %s15, 0
      %p63 = por %p61, %p62
      %s65 = sadd.s32 %s64, 1
      %p68 = scmp.eq.s32.totalorder %s9, 1
      %p69 = scmp.ne.s32.totalorder %s64, %s66
      %p70 = scmp.eq.s32.totalorder %s9, 0
      %p71 = por %p69, %p70
      %p72 = scmp.ne.s32.totalorder %s64, %s66
      %p73 = scmp.eq.s32.totalorder %s14, 1
      %p74 = por %p72, %p73
      %p75 = scmp.ne.s32.totalorder %s66, %s67
      %p76 = scmp.eq.s32.totalorder %s14, 0
      %p77 = por %p75, %p76
      %p78 = scmp.ne.s32.totalorder %s66, %s67
      %p79 = scmp.eq.s32.totalorder %s15, 1
      %p80 = por %p78, %p79
      %p82 = scmp.ne.s32.totalorder %s67, %s81
      %p83 = scmp.eq.s32.totalorder %s15, 0
      %p84 = por %p82, %p83
      %s85 = ssub.s32 %s9, %s16
      %p86 = scmp.eq.s32.totalorder %s85, 0
      %s88 = sadd.s32 %s87, 1
      %s89 = scalar_select %p86, %s87, %s88
      %p92 = pneg %p86
      %p93 = scmp.eq.s32.totalorder %s9, 1
      %p94 = por %p92, %p93
      %p95 = scmp.ne.s32.totalorder %s87, %s90
      %p96 = scmp.eq.s32.totalorder %s9, 0
      %p97 = por %p95, %p96
      %p98 = scmp.ne.s32.totalorder %s87, %s90
      %p99 = scmp.eq.s32.totalorder %s14, 1
      %p100 = por %p98, %p99
      %p101 = scmp.ne.s32.totalorder %s90, %s91
      %p102 = scmp.eq.s32.totalorder %s14, 0
      %p103 = por %p101, %p102
      %p104 = scmp.ne.s32.totalorder %s90, %s91
      %p105 = scmp.eq.s32.totalorder %s15, 1
      %p106 = por %p104, %p105
      %p108 = scmp.ne.s32.totalorder %s91, %s107
      %p109 = scmp.eq.s32.totalorder %s15, 0
      %p110 = por %p108, %p109
      %p111 = scmp.le.s32.totalorder 1, %s9
      %p112 = scmp.lt.s32.totalorder %s9, 3
      %p113 = pnand %p111, %p112
      %p114 = pneg %p113
      // Predicated region
      $region9: #{rotation_net_forward.6} parent=5 // pred_check
        _
      $region10: #{rotation_net_forward.6} parent=5 // pred_check_branch
        %116 = sbr.rel (%p113) target = $region12
      $region11: #{rotation_net_forward.6} parent=5 // pred_region
        %s117 = ssub.s32 %s9, 1
        // Predicated region
        $region13: #{rotation_net_forward.6} parent=11 // pred_check
          %p118 = pneg %p30
        $region14: #{rotation_net_forward.6} parent=11 // pred_check_branch
          %120 = sbr.rel (%p118) target = $region16
        $region15: #{rotation_net_forward.6} parent=11 // pred_region
          _
        $region16: #{rotation_net_forward.6} parent=11 // pred_fallthru
          _
        // Predicated region
        $region17: #{rotation_net_forward.6} parent=11 // pred_check
          %p121 = pneg %p77
        $region18: #{rotation_net_forward.6} parent=11 // pred_check_branch
          %123 = sbr.rel (%p121) target = $region20
        $region19: #{rotation_net_forward.6} parent=11 // pred_region
          _
        $region20: #{rotation_net_forward.6} parent=11 // pred_fallthru
          _
      $region12: #{rotation_net_forward.6} parent=5 // pred_fallthru
        _
      %p124 = scmp.lt.s32.totalorder %s9, 2
      // Predicated region
      $region21: #{rotation_net_forward.6} parent=5 // pred_check
        %p125 = pneg %p124
      $region22: #{rotation_net_forward.6} parent=5 // pred_check_branch
        %127 = sbr.rel (%p125) target = $region24
      $region23: #{rotation_net_forward.6} parent=5 // pred_region
        // Predicated region
        $region25: #{rotation_net_forward.6} parent=23 // pred_check
          %p128 = pneg %p50
        $region26: #{rotation_net_forward.6} parent=23 // pred_check_branch
          %130 = sbr.rel (%p128) target = $region28
        $region27: #{rotation_net_forward.6} parent=23 // pred_region
          %s131 = sand.u32 %s40, 1
          %s132 = sand.u32 %s40, 1
          %s133 = smul.addr %s132, 80
          %s134 = scalar_lea.vmem [#allocation2], %s133
          %s135 = smul.u32 2, %s9
          %s136 = smul.addr %s135, 8
          %s137 = scalar_lea.vmem %s1, %s136
          // Predicated region
          $region29: #{rotation_net_forward.6} parent=27 // pred_check
            _
          $region30: #{rotation_net_forward.6} parent=27 // pred_check_branch
            %139 = sbr.rel (0) target = $region32
          $region31: #{rotation_net_forward.6} parent=27 // pred_region
            // Predicated region
            $region33: #{rotation_net_forward.6} parent=31 // pred_check
              _
            $region34: #{rotation_net_forward.6} parent=31 // pred_check_branch
              %141 = sbr.rel (0) target = $region36
            $region35: #{rotation_net_forward.6} parent=31 // pred_region
              loop: start=0, step=1, limit=1
              $region37: #{rotation_net_forward.6} parent=35 // loop_pre_header
                _
              $region38: #{rotation_net_forward.6} parent=35 // loop_header
                %s143 = sphi 0, %s147
                %p144 = scmp.ge.s32.totalorder %s143, 1
                %s148 = sphi %s137, %s137
                %s149 = sphi %s134, %s134
              $region39: #{rotation_net_forward.6} parent=35 // loop_header_branch
                %146 = sbr.rel (%p144) target = $region43
              $region40: #{rotation_net_forward.6} parent=35 // loop_body
                %v150 = vld [vmem:[%s148] sm:$0xff]
                %151 = vst [vmem:[%s149] sm:$0xff] %v150
                %v152 = vld [vmem:[%s148 + $0x8] sm:$0xff]
                %153 = vst [vmem:[%s149 + $0x8] sm:$0xff] %v152
                %v154 = vld [vmem:[%s148 + $0x20] sm:$0xff]
                %155 = vst [vmem:[%s149 + $0x10] sm:$0xff] %v154
                %v156 = vld [vmem:[%s148 + $0x28] sm:$0xff]
                %157 = vst [vmem:[%s149 + $0x18] sm:$0xff] %v156
                %v158 = vld [vmem:[%s148 + $0x40] sm:$0xff]
                %159 = vst [vmem:[%s149 + $0x20] sm:$0xff] %v158
                %v160 = vld [vmem:[%s148 + $0x48] sm:$0xff]
                %161 = vst [vmem:[%s149 + $0x28] sm:$0xff] %v160
                %v162 = vld [vmem:[%s148 + $0x60] sm:$0xff]
                %163 = vst [vmem:[%s149 + $0x30] sm:$0xff] %v162
                %v164 = vld [vmem:[%s148 + $0x68] sm:$0xff]
                %165 = vst [vmem:[%s149 + $0x38] sm:$0xff] %v164
                %v166 = vld [vmem:[%s148 + $0x80] sm:$0xff]
                %167 = vst [vmem:[%s149 + $0x40] sm:$0xff] %v166
                %v168 = vld [vmem:[%s148 + $0x88] sm:$0xff]
                %169 = vst [vmem:[%s149 + $0x48] sm:$0xff] %v168
              $region41: #{rotation_net_forward.6} parent=35 // loop_footer
                %s147 = sadd.s32 1, %s143
              $region42: #{rotation_net_forward.6} parent=35 // loop_footer_branch
                %142 = sbr.rel target = $region38
              $region43: #{rotation_net_forward.6} parent=35 // loop_exit
                _
            $region36: #{rotation_net_forward.6} parent=31 // pred_fallthru
              _
            // Predicated region
            $region44: #{rotation_net_forward.6} parent=31 // pred_check
              _
            $region45: #{rotation_net_forward.6} parent=31 // pred_check_branch
              %171 = sbr.rel target = $region47
            $region46: #{rotation_net_forward.6} parent=31 // pred_region
              _
            $region47: #{rotation_net_forward.6} parent=31 // pred_fallthru
              _
          $region32: #{rotation_net_forward.6} parent=27 // pred_fallthru
            _
          %172 = vnop
        $region28: #{rotation_net_forward.6} parent=23 // pred_fallthru
          _
      $region24: #{rotation_net_forward.6} parent=5 // pred_fallthru
        _
      %p173 = scmp.le.s32.totalorder 1, %s9
      %p174 = scmp.lt.s32.totalorder %s9, 3
      %p175 = pnand %p173, %p174
      %p176 = pneg %p175
      // Predicated region
      $region48: #{rotation_net_forward.6} parent=5 // pred_check
        _
      $region49: #{rotation_net_forward.6} parent=5 // pred_check_branch
        %178 = sbr.rel (%p175) target = $region51
      $region50: #{rotation_net_forward.6} parent=5 // pred_region
        %s179 = ssub.s32 %s9, 1
        %s180 = sand.u32 %s43, 1
        %s181 = sand.u32 %s43, 1
        %s182 = smul.addr %s181, 80
        %s183 = scalar_lea.vmem [#allocation2], %s182
        // Predicated region
        $region52: #{rotation_net_forward.6} parent=50 // pred_check
          %p184 = pneg %p56
        $region53: #{rotation_net_forward.6} parent=50 // pred_check_branch
          %186 = sbr.rel (%p184) target = $region55
        $region54: #{rotation_net_forward.6} parent=50 // pred_region
          _
        $region55: #{rotation_net_forward.6} parent=50 // pred_fallthru
          _
        %p187 = pneg %p30
        %p188 = pneg %p27
        %s189 = sand.u32 %s43, 1
        %s190 = sand.u32 %s43, 1
        %s191 = smul.addr %s190, 80
        %s192 = scalar_lea.vmem [#allocation2], %s191
        %p193 = pneg %p56
        %p194 = pneg %p53
        %p195 = pneg %p77
        %p196 = pneg %p74
        %p197 = pneg %p103
        %p198 = pneg %p100
        %s199 = sand.u32 %s90, 1
        %s200 = sand.u32 %s90, 1
        %s201 = smul.addr %s200, 32
        %s202 = scalar_lea.vmem [#allocation3], %s201
        %s203 = smul.u32 2, %s14
        %s204 = smul.u32 2, %s14
        %v206 = vld [vmem:[%s0] sm:$0xf]
        %v207 = vld [vmem:[%s0 + $0x4] sm:$0xf]
        %v208 = vld [vmem:[%s183] sm:$0xff]
        %v209 = vld [vmem:[%s183 + $0x8] sm:$0xff]
        %v210 = vld [vmem:[%s183 + $0x10] sm:$0xff]
        %v211 = vld [vmem:[%s183 + $0x18] sm:$0xff]
        %v212 = vld [vmem:[%s183 + $0x20] sm:$0xff]
        %v213 = vld [vmem:[%s183 + $0x28] sm:$0xff]
        %v214 = vld [vmem:[%s183 + $0x30] sm:$0xff]
        %v215 = vld [vmem:[%s183 + $0x38] sm:$0xff]
        %v216 = vld [vmem:[%s183 + $0x40] sm:$0xf]
        %v217 = vld [vmem:[%s183 + $0x48] sm:$0xf]
        %v218 = vpack.c.bf16 %v210, %v208
        %v219 = vpack.c.bf16 %v211, %v209
        %v220 = vpack.c.bf16 %v214, %v212
        %v221 = vpack.c.bf16 %v215, %v213
        %v222 = vpack.c.bf16 %v216, %v216
        %v223 = vpack.c.bf16 %v217, %v217
        %v224 = vld [vmem:[%s2] sm:$0xff]
        %v225 = vld [vmem:[%s2 + $0x8] sm:$0xff]
        %227 = vset.pattern.permute.xlu0 0
        %228 = vperm.xlu0 %227, %v224
        %v229 = vpop.permute.xlu0 %228
        %232 = vset.pattern.permute.xlu0 0
        %233 = vperm.xlu0 %232, %v225
        %v234 = vpop.permute.xlu0 %233
        %v238 = vunpack.c.l.b16 %v206
        %v239 = vunpack.c.l.b16 %v207
        %v240 = vpack.c.b16 %v239, %v238
        %vm241 = vcmask 293888
        %v243 = vsel %vm241, %v240, 0
        %vm245 = vcmask 1041408
        %v247 = vsel %vm245, %v222, 0
        %v250 = vsel %vm245, %v223, 0
        %252 = vmatprep.subr.bf16.mxu0 0
        %253 = vmatpush1.bf16.msra.mxu0 0
        %254 = vmatprep.subr.bf16.mxu0 0
        %255 = vmatpush1.bf16.msra.mxu0 0
        %256 = vmatprep.subr.bf16.mxu0 0
        %257 = vmatpush1.bf16.msra.mxu0 0
        %258 = vmatprep.subr.bf16.mxu0 0
        %259 = vmatpush1.bf16.msra.mxu0 0
        %260 = vmatprep.subr.bf16.mxu0 0
        %261 = vmatpush1.bf16.msra.mxu0 0
        %262 = vmatprep.subr.bf16.mxu0 %v250
        %263 = vmatpush1.bf16.msra.mxu0 %v247
        %264 = vmatprep.subr.bf16.mxu0 %v221
        %265 = vmatpush1.bf16.msra.mxu0 %v220
        %266 = vmatprep.subr.bf16.mxu0 %v219
        %267 = vmatpush1.bf16.msra.mxu0 %v218
        %268 = vmatprep.subr.bf16.mxu0 0
        %269 = vmatpush2.bf16.msra.mxu0 0
        %270 = vmatprep.subr.bf16.mxu0 0
        %271 = vmatpush2.bf16.msra.mxu0 0
        %272 = vmatprep.subr.bf16.mxu0 0
        %273 = vmatpush2.bf16.msra.mxu0 0
        %274 = vmatprep.subr.bf16.mxu0 0
        %275 = vmatpush2.bf16.msra.mxu0 0
        %276 = vmatprep.subr.bf16.mxu0 0
        %277 = vmatpush2.bf16.msra.mxu0 0
        %278 = vmatprep.subr.bf16.mxu0 0
        %279 = vmatpush2.bf16.msra.mxu0 0
        %280 = vmatprep.subr.bf16.mxu0 0
        %281 = vmatpush2.bf16.msra.mxu0 0
        %282 = vmatprep.subr.bf16.mxu0 0
        %283 = vmatpush2.bf16.msra.mxu0 0
        %284 = vmatprep.mubr.bf16.mxu0 0
        %285 = vmatmul.mubr.bf16.gmra.mxu0 %v243
        %v286 = vpop.f32.mrf.mxu0
        %v287 = vadd.f32 %v229, %v286
        %v288 = vpop.f32.mrf.mxu0
        %v289 = vadd.f32 %v229, %v288
        %v290 = vpop.f32.mrf.mxu0
        %v291 = vadd.f32 %v234, %v290
        %v292 = vpop.f32.mrf.mxu0
        %v293 = vadd.f32 %v234, %v292
        %294 = vdwg.mxu0
        %v295 = vsub.f32 0.0, %v287
        %v296 = vsub.f32 0.0, %v289
        %v297 = vsub.f32 0.0, %v291
        %v298 = vsub.f32 0.0, %v293
        %v299 = vmul.f32 %v295, 1.442695
        %v300 = vpow.pop %v299
        %v301 = vmul.f32 %v296, 1.442695
        %v302 = vpow.pop %v301
        %v303 = vmul.f32 %v297, 1.442695
        %v304 = vpow.pop %v303
        %v305 = vmul.f32 %v298, 1.442695
        %v306 = vpow.pop %v305
        %v307 = vadd.f32 %v300, 1.0
        %v308 = vadd.f32 %v302, 1.0
        %v309 = vadd.f32 %v304, 1.0
        %v310 = vadd.f32 %v306, 1.0
        %v311 = vrcp.pop %v307
        %v312 = vrcp.pop %v308
        %v313 = vrcp.pop %v309
        %v314 = vrcp.pop %v310
        %v315 = vmul.f32 %v287, %v311
        %v316 = vmul.f32 %v289, %v312
        %v317 = vmul.f32 %v291, %v313
        %v318 = vmul.f32 %v293, %v314
        %319 = vst [vmem:[%s202] sm:$0xff] %v315
        %320 = vst [vmem:[%s202 + $0x8] sm:$0xff] %v316
        %321 = vst [vmem:[%s202 + $0x10] sm:$0xff] %v317
        %322 = vst [vmem:[%s202 + $0x18] sm:$0xff] %v318
        %s323 = sand.u32 %s90, 1
        %s324 = sand.u32 %s90, 1
        %s325 = smul.addr %s324, 32
        %s326 = scalar_lea.vmem [#allocation3], %s325
        // Predicated region
        $region56: #{rotation_net_forward.6} parent=50 // pred_check
          %p327 = pneg %p100
        $region57: #{rotation_net_forward.6} parent=50 // pred_check_branch
          %329 = sbr.rel (%p327) target = $region59
        $region58: #{rotation_net_forward.6} parent=50 // pred_region
          %s330 = smul.u32 2, %s14
          %s331 = smul.addr %s330, 8
          %s332 = scalar_lea.vmem %s3, %s331
          // Predicated region
          $region60: #{rotation_net_forward.6} parent=58 // pred_check
            _
          $region61: #{rotation_net_forward.6} parent=58 // pred_check_branch
            %334 = sbr.rel (0) target = $region63
          $region62: #{rotation_net_forward.6} parent=58 // pred_region
            // Predicated region
            $region64: #{rotation_net_forward.6} parent=62 // pred_check
              _
            $region65: #{rotation_net_forward.6} parent=62 // pred_check_branch
              %336 = sbr.rel (0) target = $region67
            $region66: #{rotation_net_forward.6} parent=62 // pred_region
              loop: start=0, step=1, limit=1
              $region68: #{rotation_net_forward.6} parent=66 // loop_pre_header
                _
              $region69: #{rotation_net_forward.6} parent=66 // loop_header
                %s338 = sphi 0, %s342
                %p339 = scmp.ge.s32.totalorder %s338, 1
                %s343 = sphi %s326, %s326
                %s344 = sphi %s332, %s332
              $region70: #{rotation_net_forward.6} parent=66 // loop_header_branch
                %341 = sbr.rel (%p339) target = $region74
              $region71: #{rotation_net_forward.6} parent=66 // loop_body
                %v345 = vld [vmem:[%s343] sm:$0xff]
                %346 = vst [vmem:[%s344] sm:$0xff] %v345
                %v347 = vld [vmem:[%s343 + $0x8] sm:$0xff]
                %348 = vst [vmem:[%s344 + $0x8] sm:$0xff] %v347
                %v349 = vld [vmem:[%s343 + $0x10] sm:$0xff]
                %350 = vst [vmem:[%s344 + $0x20] sm:$0xff] %v349
                %v351 = vld [vmem:[%s343 + $0x18] sm:$0xff]
                %352 = vst [vmem:[%s344 + $0x28] sm:$0xff] %v351
              $region72: #{rotation_net_forward.6} parent=66 // loop_footer
                %s342 = sadd.s32 1, %s338
              $region73: #{rotation_net_forward.6} parent=66 // loop_footer_branch
                %337 = sbr.rel target = $region69
              $region74: #{rotation_net_forward.6} parent=66 // loop_exit
                _
            $region67: #{rotation_net_forward.6} parent=62 // pred_fallthru
              _
            // Predicated region
            $region75: #{rotation_net_forward.6} parent=62 // pred_check
              _
            $region76: #{rotation_net_forward.6} parent=62 // pred_check_branch
              %354 = sbr.rel target = $region78
            $region77: #{rotation_net_forward.6} parent=62 // pred_region
              _
            $region78: #{rotation_net_forward.6} parent=62 // pred_fallthru
              _
          $region63: #{rotation_net_forward.6} parent=58 // pred_fallthru
            _
          %355 = vnop
        $region59: #{rotation_net_forward.6} parent=50 // pred_fallthru
          _
      $region51: #{rotation_net_forward.6} parent=5 // pred_fallthru
        _
      %p356 = scmp.le.s32.totalorder 2, %s9
      // Predicated region
      $region79: #{rotation_net_forward.6} parent=5 // pred_check
        %p357 = pneg %p356
      $region80: #{rotation_net_forward.6} parent=5 // pred_check_branch
        %359 = sbr.rel (%p357) target = $region82
      $region81: #{rotation_net_forward.6} parent=5 // pred_region
        %s360 = ssub.s32 %s9, 2
        // Predicated region
        $region83: #{rotation_net_forward.6} parent=81 // pred_check
          %p361 = pneg %p106
        $region84: #{rotation_net_forward.6} parent=81 // pred_check_branch
          %363 = sbr.rel (%p361) target = $region86
        $region85: #{rotation_net_forward.6} parent=81 // pred_region
          %s364 = sand.u32 %s91, 1
          %s365 = sand.u32 %s91, 1
          %s366 = smul.addr %s365, 32
          %s367 = scalar_lea.vmem [#allocation3], %s366
        $region86: #{rotation_net_forward.6} parent=81 // pred_fallthru
          _
      $region82: #{rotation_net_forward.6} parent=5 // pred_fallthru
        _
    $region6: #{rotation_net_forward.6} parent=1 // loop_footer
      %s13 = sadd.s32 1, %s9
    $region7: #{rotation_net_forward.6} parent=1 // loop_footer_branch
      %8 = sbr.rel target = $region3
    $region8: #{rotation_net_forward.6} parent=1 // loop_exit
      _

// kernel: rotation_net_forward.7
$region0: #{rotation_net_forward.7}
  #allocation0 [shape = 'u32[]', space=smem, size = 0x4, offset = 0x4, fixed_abs, tag = 'smem constant byte address 0x4 - core index']
  #allocation1 [shape = 'u32[144,128]{1,0:T(1,128)}', space=vmem, size = 0x12000, scoped, tag = 'internal scratch']
  %s0 = inlined_call_operand.vmem [shape: bf16[16,144], index: 0, kind: input, shape index: {}]
  %s1 = inlined_call_operand.vmem [shape: f32[144,512], index: 1, kind: input, shape index: {}]
  %s2 = inlined_call_operand.vmem [shape: f32[16,1], index: 2, kind: input, shape index: {}]
  %s3 = inlined_call_operand.vmem [shape: f32[16,512], index: 3, kind: output, shape index: {}]
  %s4 = sld [smem:[#allocation0]]
  $region87: #{rotation_net_forward.7} parent=0
    _
  %s6 = ssub.s32 1, %s4
  %s7 = scalar_select 0, %s6, %s4
  $region1: #{rotation_net_forward.7} parent=0
    #allocation2 [shape = 'u8[294912]{0}', space=vmem, size = 0x48000, scoped, tag = 'input window, operand 1']
    #allocation3 [shape = 'u8[32768]{0}', space=vmem, size = 0x8000, scoped, tag = 'output window, operand 0']
    loop: start=0, step=1, limit=4
    $region2: #{rotation_net_forward.7} parent=1 // loop_pre_header
      _
    $region3: #{rotation_net_forward.7} parent=1 // loop_header
      %s9 = sphi 0, %s13
      %p10 = scmp.ge.s32.totalorder %s9, 4
      %s17 = sphi 0, %s17
      %s19 = sphi 0, %s17
      %s20 = sphi 0, %s19
      %s34 = sphi 0, %s20
      %s40 = sphi 0, %s42
      %s43 = sphi 0, %s40
      %s44 = sphi 0, %s43
      %s60 = sphi 0, %s44
      %s64 = sphi 0, %s64
      %s66 = sphi 0, %s64
      %s67 = sphi 0, %s66
      %s81 = sphi 0, %s67
      %s87 = sphi 0, %s89
      %s90 = sphi 0, %s87
      %s91 = sphi 0, %s90
      %s107 = sphi 0, %s91
    $region4: #{rotation_net_forward.7} parent=1 // loop_header_branch
      %12 = sbr.rel (%p10) target = $region8
    $region5: #{rotation_net_forward.7} parent=1 // loop_body
      %s14 = ssub.s32 %s9, 1
      %s15 = ssub.s32 %s9, 2
      %s16 = sadd.s32 %s9, 1
      %s18 = sadd.s32 %s17, 1
      %p21 = scmp.eq.s32.totalorder %s9, 1
      %p22 = scmp.ne.s32.totalorder %s17, %s19
      %p23 = scmp.eq.s32.totalorder %s9, 0
      %p24 = por %p22, %p23
      %p25 = scmp.ne.s32.totalorder %s17, %s19
      %p26 = scmp.eq.s32.totalorder %s14, 1
      %p27 = por %p25, %p26
      %p28 = scmp.ne.s32.totalorder %s19, %s20
      %p29 = scmp.eq.s32.totalorder %s14, 0
      %p30 = por %p28, %p29
      %p31 = scmp.ne.s32.totalorder %s19, %s20
      %p32 = scmp.eq.s32.totalorder %s15, 1
      %p33 = por %p31, %p32
      %p35 = scmp.ne.s32.totalorder %s20, %s34
      %p36 = scmp.eq.s32.totalorder %s15, 0
      %p37 = por %p35, %p36
      %s38 = ssub.s32 %s9, %s16
      %p39 = scmp.eq.s32.totalorder %s38, 0
      %s41 = sadd.s32 %s40, 1
      %s42 = scalar_select %p39, %s40, %s41
      %p45 = pneg %p39
      %p46 = scmp.eq.s32.totalorder %s9, 1
      %p47 = por %p45, %p46
      %p48 = scmp.ne.s32.totalorder %s40, %s43
      %p49 = scmp.eq.s32.totalorder %s9, 0
      %p50 = por %p48, %p49
      %p51 = scmp.ne.s32.totalorder %s40, %s43
      %p52 = scmp.eq.s32.totalorder %s14, 1
      %p53 = por %p51, %p52
      %p54 = scmp.ne.s32.totalorder %s43, %s44
      %p55 = scmp.eq.s32.totalorder %s14, 0
      %p56 = por %p54, %p55
      %p57 = scmp.ne.s32.totalorder %s43, %s44
      %p58 = scmp.eq.s32.totalorder %s15, 1
      %p59 = por %p57, %p58
      %p61 = scmp.ne.s32.totalorder %s44, %s60
      %p62 = scmp.eq.s32.totalorder %s15, 0
      %p63 = por %p61, %p62
      %s65 = sadd.s32 %s64, 1
      %p68 = scmp.eq.s32.totalorder %s9, 1
      %p69 = scmp.ne.s32.totalorder %s64, %s66
      %p70 = scmp.eq.s32.totalorder %s9, 0
      %p71 = por %p69, %p70
      %p72 = scmp.ne.s32.totalorder %s64, %s66
      %p73 = scmp.eq.s32.totalorder %s14, 1
      %p74 = por %p72, %p73
      %p75 = scmp.ne.s32.totalorder %s66, %s67
      %p76 = scmp.eq.s32.totalorder %s14, 0
      %p77 = por %p75, %p76
      %p78 = scmp.ne.s32.totalorder %s66, %s67
      %p79 = scmp.eq.s32.totalorder %s15, 1
      %p80 = por %p78, %p79
      %p82 = scmp.ne.s32.totalorder %s67, %s81
      %p83 = scmp.eq.s32.totalorder %s15, 0
      %p84 = por %p82, %p83
      %s85 = ssub.s32 %s9, %s16
      %p86 = scmp.eq.s32.totalorder %s85, 0
      %s88 = sadd.s32 %s87, 1
      %s89 = scalar_select %p86, %s87, %s88
      %p92 = pneg %p86
      %p93 = scmp.eq.s32.totalorder %s9, 1
      %p94 = por %p92, %p93
      %p95 = scmp.ne.s32.totalorder %s87, %s90
      %p96 = scmp.eq.s32.totalorder %s9, 0
      %p97 = por %p95, %p96
      %p98 = scmp.ne.s32.totalorder %s87, %s90
      %p99 = scmp.eq.s32.totalorder %s14, 1
      %p100 = por %p98, %p99
      %p101 = scmp.ne.s32.totalorder %s90, %s91
      %p102 = scmp.eq.s32.totalorder %s14, 0
      %p103 = por %p101, %p102
      %p104 = scmp.ne.s32.totalorder %s90, %s91
      %p105 = scmp.eq.s32.totalorder %s15, 1
      %p106 = por %p104, %p105
      %p108 = scmp.ne.s32.totalorder %s91, %s107
      %p109 = scmp.eq.s32.totalorder %s15, 0
      %p110 = por %p108, %p109
      %p111 = scmp.le.s32.totalorder 1, %s9
      %p112 = scmp.lt.s32.totalorder %s9, 3
      %p113 = pnand %p111, %p112
      %p114 = pneg %p113
      // Predicated region
      $region9: #{rotation_net_forward.7} parent=5 // pred_check
        _
      $region10: #{rotation_net_forward.7} parent=5 // pred_check_branch
        %116 = sbr.rel (%p113) target = $region12
      $region11: #{rotation_net_forward.7} parent=5 // pred_region
        %s117 = ssub.s32 %s9, 1
        // Predicated region
        $region13: #{rotation_net_forward.7} parent=11 // pred_check
          %p118 = pneg %p30
        $region14: #{rotation_net_forward.7} parent=11 // pred_check_branch
          %120 = sbr.rel (%p118) target = $region16
        $region15: #{rotation_net_forward.7} parent=11 // pred_region
          _
        $region16: #{rotation_net_forward.7} parent=11 // pred_fallthru
          _
        // Predicated region
        $region17: #{rotation_net_forward.7} parent=11 // pred_check
          %p121 = pneg %p77
        $region18: #{rotation_net_forward.7} parent=11 // pred_check_branch
          %123 = sbr.rel (%p121) target = $region20
        $region19: #{rotation_net_forward.7} parent=11 // pred_region
          _
        $region20: #{rotation_net_forward.7} parent=11 // pred_fallthru
          _
      $region12: #{rotation_net_forward.7} parent=5 // pred_fallthru
        _
      %p124 = scmp.lt.s32.totalorder %s9, 2
      // Predicated region
      $region21: #{rotation_net_forward.7} parent=5 // pred_check
        %p125 = pneg %p124
      $region22: #{rotation_net_forward.7} parent=5 // pred_check_branch
        %127 = sbr.rel (%p125) target = $region24
      $region23: #{rotation_net_forward.7} parent=5 // pred_region
        // Predicated region
        $region25: #{rotation_net_forward.7} parent=23 // pred_check
          %p128 = pneg %p50
        $region26: #{rotation_net_forward.7} parent=23 // pred_check_branch
          %130 = sbr.rel (%p128) target = $region28
        $region27: #{rotation_net_forward.7} parent=23 // pred_region
          %s131 = sand.u32 %s40, 1
          %s132 = sand.u32 %s40, 1
          %s133 = smul.addr %s132, 288
          %s134 = scalar_lea.vmem [#allocation2], %s133
          %s135 = smul.u32 2, %s9
          %s136 = smul.addr %s135, 8
          %s137 = scalar_lea.vmem %s1, %s136
          // Predicated region
          $region29: #{rotation_net_forward.7} parent=27 // pred_check
            _
          $region30: #{rotation_net_forward.7} parent=27 // pred_check_branch
            %139 = sbr.rel (0) target = $region32
          $region31: #{rotation_net_forward.7} parent=27 // pred_region
            // Predicated region
            $region33: #{rotation_net_forward.7} parent=31 // pred_check
              _
            $region34: #{rotation_net_forward.7} parent=31 // pred_check_branch
              %141 = sbr.rel (0) target = $region36
            $region35: #{rotation_net_forward.7} parent=31 // pred_region
              loop: start=0, step=1, limit=1
              $region37: #{rotation_net_forward.7} parent=35 // loop_pre_header
                _
              $region38: #{rotation_net_forward.7} parent=35 // loop_header
                %s143 = sphi 0, %s147
                %p144 = scmp.ge.s32.totalorder %s143, 1
                %s148 = sphi %s137, %s137
                %s149 = sphi %s134, %s134
              $region39: #{rotation_net_forward.7} parent=35 // loop_header_branch
                %146 = sbr.rel (%p144) target = $region43
              $region40: #{rotation_net_forward.7} parent=35 // loop_body
                %v150 = vld [vmem:[%s148] sm:$0xff]
                %151 = vst [vmem:[%s149] sm:$0xff] %v150
                %v152 = vld [vmem:[%s148 + $0x8] sm:$0xff]
                %153 = vst [vmem:[%s149 + $0x8] sm:$0xff] %v152
                %v154 = vld [vmem:[%s148 + $0x20] sm:$0xff]
                %155 = vst [vmem:[%s149 + $0x10] sm:$0xff] %v154
                %v156 = vld [vmem:[%s148 + $0x28] sm:$0xff]
                %157 = vst [vmem:[%s149 + $0x18] sm:$0xff] %v156
                %v158 = vld [vmem:[%s148 + $0x40] sm:$0xff]
                %159 = vst [vmem:[%s149 + $0x20] sm:$0xff] %v158
                %v160 = vld [vmem:[%s148 + $0x48] sm:$0xff]
                %161 = vst [vmem:[%s149 + $0x28] sm:$0xff] %v160
                %v162 = vld [vmem:[%s148 + $0x60] sm:$0xff]
                %163 = vst [vmem:[%s149 + $0x30] sm:$0xff] %v162
                %v164 = vld [vmem:[%s148 + $0x68] sm:$0xff]
                %165 = vst [vmem:[%s149 + $0x38] sm:$0xff] %v164
                %v166 = vld [vmem:[%s148 + $0x80] sm:$0xff]
                %167 = vst [vmem:[%s149 + $0x40] sm:$0xff] %v166
                %v168 = vld [vmem:[%s148 + $0x88] sm:$0xff]
                %169 = vst [vmem:[%s149 + $0x48] sm:$0xff] %v168
                %v170 = vld [vmem:[%s148 + $0xa0] sm:$0xff]
                %171 = vst [vmem:[%s149 + $0x50] sm:$0xff] %v170
                %v172 = vld [vmem:[%s148 + $0xa8] sm:$0xff]
                %173 = vst [vmem:[%s149 + $0x58] sm:$0xff] %v172
                %v174 = vld [vmem:[%s148 + $0xc0] sm:$0xff]
                %175 = vst [vmem:[%s149 + $0x60] sm:$0xff] %v174
                %v176 = vld [vmem:[%s148 + $0xc8] sm:$0xff]
                %177 = vst [vmem:[%s149 + $0x68] sm:$0xff] %v176
                %v178 = vld [vmem:[%s148 + $0xe0] sm:$0xff]
                %179 = vst [vmem:[%s149 + $0x70] sm:$0xff] %v178
                %v180 = vld [vmem:[%s148 + $0xe8] sm:$0xff]
                %181 = vst [vmem:[%s149 + $0x78] sm:$0xff] %v180
                %v182 = vld [vmem:[%s148 + $0x100] sm:$0xff]
                %183 = vst [vmem:[%s149 + $0x80] sm:$0xff] %v182
                %v184 = vld [vmem:[%s148 + $0x108] sm:$0xff]
                %185 = vst [vmem:[%s149 + $0x88] sm:$0xff] %v184
                %v186 = vld [vmem:[%s148 + $0x120] sm:$0xff]
                %187 = vst [vmem:[%s149 + $0x90] sm:$0xff] %v186
                %v188 = vld [vmem:[%s148 + $0x128] sm:$0xff]
                %189 = vst [vmem:[%s149 + $0x98] sm:$0xff] %v188
                %v190 = vld [vmem:[%s148 + $0x140] sm:$0xff]
                %191 = vst [vmem:[%s149 + $0xa0] sm:$0xff] %v190
                %v192 = vld [vmem:[%s148 + $0x148] sm:$0xff]
                %193 = vst [vmem:[%s149 + $0xa8] sm:$0xff] %v192
                %v194 = vld [vmem:[%s148 + $0x160] sm:$0xff]
                %195 = vst [vmem:[%s149 + $0xb0] sm:$0xff] %v194
                %v196 = vld [vmem:[%s148 + $0x168] sm:$0xff]
                %197 = vst [vmem:[%s149 + $0xb8] sm:$0xff] %v196
                %v198 = vld [vmem:[%s148 + $0x180] sm:$0xff]
                %199 = vst [vmem:[%s149 + $0xc0] sm:$0xff] %v198
                %v200 = vld [vmem:[%s148 + $0x188] sm:$0xff]
                %201 = vst [vmem:[%s149 + $0xc8] sm:$0xff] %v200
                %v202 = vld [vmem:[%s148 + $0x1a0] sm:$0xff]
                %203 = vst [vmem:[%s149 + $0xd0] sm:$0xff] %v202
                %v204 = vld [vmem:[%s148 + $0x1a8] sm:$0xff]
                %205 = vst [vmem:[%s149 + $0xd8] sm:$0xff] %v204
                %v206 = vld [vmem:[%s148 + $0x1c0] sm:$0xff]
                %207 = vst [vmem:[%s149 + $0xe0] sm:$0xff] %v206
                %v208 = vld [vmem:[%s148 + $0x1c8] sm:$0xff]
                %209 = vst [vmem:[%s149 + $0xe8] sm:$0xff] %v208
                %v210 = vld [vmem:[%s148 + $0x1e0] sm:$0xff]
                %211 = vst [vmem:[%s149 + $0xf0] sm:$0xff] %v210
                %v212 = vld [vmem:[%s148 + $0x1e8] sm:$0xff]
                %213 = vst [vmem:[%s149 + $0xf8] sm:$0xff] %v212
                %v214 = vld [vmem:[%s148 + $0x200] sm:$0xff]
                %215 = vst [vmem:[%s149 + $0x100] sm:$0xff] %v214
                %v216 = vld [vmem:[%s148 + $0x208] sm:$0xff]
                %217 = vst [vmem:[%s149 + $0x108] sm:$0xff] %v216
                %v218 = vld [vmem:[%s148 + $0x220] sm:$0xff]
                %219 = vst [vmem:[%s149 + $0x110] sm:$0xff] %v218
                %v220 = vld [vmem:[%s148 + $0x228] sm:$0xff]
                %221 = vst [vmem:[%s149 + $0x118] sm:$0xff] %v220
              $region41: #{rotation_net_forward.7} parent=35 // loop_footer
                %s147 = sadd.s32 1, %s143
              $region42: #{rotation_net_forward.7} parent=35 // loop_footer_branch
                %142 = sbr.rel target = $region38
              $region43: #{rotation_net_forward.7} parent=35 // loop_exit
                _
            $region36: #{rotation_net_forward.7} parent=31 // pred_fallthru
              _
            // Predicated region
            $region44: #{rotation_net_forward.7} parent=31 // pred_check
              _
            $region45: #{rotation_net_forward.7} parent=31 // pred_check_branch
              %223 = sbr.rel target = $region47
            $region46: #{rotation_net_forward.7} parent=31 // pred_region
              _
            $region47: #{rotation_net_forward.7} parent=31 // pred_fallthru
              _
          $region32: #{rotation_net_forward.7} parent=27 // pred_fallthru
            _
          %224 = vnop
        $region28: #{rotation_net_forward.7} parent=23 // pred_fallthru
          _
      $region24: #{rotation_net_forward.7} parent=5 // pred_fallthru
        _
      %p225 = scmp.le.s32.totalorder 1, %s9
      %p226 = scmp.lt.s32.totalorder %s9, 3
      %p227 = pnand %p225, %p226
      %p228 = pneg %p227
      // Predicated region
      $region48: #{rotation_net_forward.7} parent=5 // pred_check
        _
      $region49: #{rotation_net_forward.7} parent=5 // pred_check_branch
        %230 = sbr.rel (%p227) target = $region51
      $region50: #{rotation_net_forward.7} parent=5 // pred_region
        %s231 = ssub.s32 %s9, 1
        %s232 = sand.u32 %s43, 1
        %s233 = sand.u32 %s43, 1
        %s234 = smul.addr %s233, 288
        %s235 = scalar_lea.vmem [#allocation2], %s234
        // Predicated region
        $region52: #{rotation_net_forward.7} parent=50 // pred_check
          %p236 = pneg %p56
        $region53: #{rotation_net_forward.7} parent=50 // pred_check_branch
          %238 = sbr.rel (%p236) target = $region55
        $region54: #{rotation_net_forward.7} parent=50 // pred_region
          _
        $region55: #{rotation_net_forward.7} parent=50 // pred_fallthru
          _
        %p239 = pneg %p30
        %p240 = pneg %p27
        %s241 = sand.u32 %s43, 1
        %s242 = sand.u32 %s43, 1
        %s243 = smul.addr %s242, 288
        %s244 = scalar_lea.vmem [#allocation2], %s243
        %p245 = pneg %p56
        %p246 = pneg %p53
        %p247 = pneg %p77
        %p248 = pneg %p74
        %p249 = pneg %p103
        %p250 = pneg %p100
        %s251 = sand.u32 %s90, 1
        %s252 = sand.u32 %s90, 1
        %s253 = smul.addr %s252, 32
        %s254 = scalar_lea.vmem [#allocation3], %s253
        %s255 = smul.u32 2, %s14
        %s256 = smul.u32 2, %s14
        %v258 = vld [vmem:[%s0] sm:$0xff]
        %v259 = vld [vmem:[%s0 + $0x8] sm:$0xff]
        %v260 = vld [vmem:[%s235] sm:$0xff]
        %v261 = vld [vmem:[%s235 + $0x8] sm:$0xff]
        %v262 = vld [vmem:[%s235 + $0x10] sm:$0xff]
        %v263 = vld [vmem:[%s235 + $0x18] sm:$0xff]
        %v264 = vld [vmem:[%s235 + $0x20] sm:$0xff]
        %v265 = vld [vmem:[%s235 + $0x28] sm:$0xff]
        %v266 = vld [vmem:[%s235 + $0x30] sm:$0xff]
        %v267 = vld [vmem:[%s235 + $0x38] sm:$0xff]
        %v268 = vld [vmem:[%s235 + $0x40] sm:$0xff]
        %v269 = vld [vmem:[%s235 + $0x48] sm:$0xff]
        %v270 = vld [vmem:[%s235 + $0x50] sm:$0xff]
        %v271 = vld [vmem:[%s235 + $0x58] sm:$0xff]
        %v272 = vld [vmem:[%s235 + $0x60] sm:$0xff]
        %v273 = vld [vmem:[%s235 + $0x68] sm:$0xff]
        %v274 = vld [vmem:[%s235 + $0x70] sm:$0xff]
        %v275 = vld [vmem:[%s235 + $0x78] sm:$0xff]
        %v276 = vld [vmem:[%s235 + $0x80] sm:$0xff]
        %v277 = vld [vmem:[%s235 + $0x88] sm:$0xff]
        %v278 = vld [vmem:[%s235 + $0x90] sm:$0xff]
        %v279 = vld [vmem:[%s235 + $0x98] sm:$0xff]
        %v280 = vld [vmem:[%s235 + $0xa0] sm:$0xff]
        %v281 = vld [vmem:[%s235 + $0xa8] sm:$0xff]
        %v282 = vld [vmem:[%s235 + $0xb0] sm:$0xff]
        %v283 = vld [vmem:[%s235 + $0xb8] sm:$0xff]
        %v284 = vld [vmem:[%s235 + $0xc0] sm:$0xff]
        %v285 = vld [vmem:[%s235 + $0xc8] sm:$0xff]
        %v286 = vld [vmem:[%s235 + $0xd0] sm:$0xff]
        %v287 = vld [vmem:[%s235 + $0xd8] sm:$0xff]
        %v288 = vld [vmem:[%s235 + $0xe0] sm:$0xff]
        %v289 = vld [vmem:[%s235 + $0xe8] sm:$0xff]
        %v290 = vld [vmem:[%s235 + $0xf0] sm:$0xff]
        %v291 = vld [vmem:[%s235 + $0xf8] sm:$0xff]
        %v292 = vld [vmem:[%s235 + $0x100] sm:$0xff]
        %v293 = vld [vmem:[%s235 + $0x108] sm:$0xff]
        %v294 = vld [vmem:[%s235 + $0x110] sm:$0xff]
        %v295 = vld [vmem:[%s235 + $0x118] sm:$0xff]
        %v296 = vpack.c.bf16 %v262, %v260
        %v297 = vpack.c.bf16 %v263, %v261
        %v298 = vpack.c.bf16 %v266, %v264
        %v299 = vpack.c.bf16 %v267, %v265
        %v300 = vpack.c.bf16 %v270, %v268
        %v301 = vpack.c.bf16 %v271, %v269
        %v302 = vpack.c.bf16 %v274, %v272
        %v303 = vpack.c.bf16 %v275, %v273
        %v304 = vpack.c.bf16 %v278, %v276
        %v305 = vpack.c.bf16 %v279, %v277
        %v306 = vpack.c.bf16 %v282, %v280
        %v307 = vpack.c.bf16 %v283, %v281
        %v308 = vpack.c.bf16 %v286, %v284
        %v309 = vpack.c.bf16 %v287, %v285
        %v310 = vpack.c.bf16 %v290, %v288
        %v311 = vpack.c.bf16 %v291, %v289
        %v312 = vpack.c.bf16 %v294, %v292
        %v313 = vpack.c.bf16 %v295, %v293
        %v314 = vld [vmem:[%s2] sm:$0xff]
        %v315 = vld [vmem:[%s2 + $0x8] sm:$0xff]
        %317 = vset.pattern.permute.xlu0 0
        %318 = vperm.xlu0 %317, %v314
        %v319 = vpop.permute.xlu0 %318
        %322 = vset.pattern.permute.xlu0 0
        %323 = vperm.xlu0 %322, %v315
        %v324 = vpop.permute.xlu0 %323
        %v328 = vunpack.c.l.b16 %v258
        %v329 = vunpack.c.h.b16 %v258
        %v330 = vunpack.c.l.b16 %v259
        %v331 = vunpack.c.h.b16 %v259
        %v332 = vpack.c.b16 %v330, %v328
        %v333 = vpack.c.b16 %v331, %v329
        %vm335 = vcmask 130048
        %v337 = vsel %vm335, %v333, 0
        %339 = vmatprep.subr.bf16.mxu0 %v311
        %340 = vmatpush1.bf16.msra.mxu0 %v310
        %341 = vmatprep.subr.bf16.mxu0 %v309
        %342 = vmatpush1.bf16.msra.mxu0 %v308
        %343 = vmatprep.subr.bf16.mxu0 %v307
        %344 = vmatpush1.bf16.msra.mxu0 %v306
        %345 = vmatprep.subr.bf16.mxu0 %v305
        %346 = vmatpush1.bf16.msra.mxu0 %v304
        %347 = vmatprep.subr.bf16.mxu0 %v303
        %348 = vmatpush1.bf16.msra.mxu0 %v302
        %349 = vmatprep.subr.bf16.mxu0 %v301
        %350 = vmatpush1.bf16.msra.mxu0 %v300
        %351 = vmatprep.subr.bf16.mxu0 %v299
        %352 = vmatpush1.bf16.msra.mxu0 %v298
        %353 = vmatprep.subr.bf16.mxu0 %v297
        %354 = vmatpush1.bf16.msra.mxu0 %v296
        %355 = vmatprep.subr.bf16.mxu0 0
        %356 = vmatpush2.bf16.msra.mxu0 0
        %357 = vmatprep.subr.bf16.mxu0 0
        %358 = vmatpush2.bf16.msra.mxu0 0
        %359 = vmatprep.subr.bf16.mxu0 0
        %360 = vmatpush2.bf16.msra.mxu0 0
        %361 = vmatprep.subr.bf16.mxu0 0
        %362 = vmatpush2.bf16.msra.mxu0 0
        %363 = vmatprep.subr.bf16.mxu0 0
        %364 = vmatpush2.bf16.msra.mxu0 0
        %365 = vmatprep.subr.bf16.mxu0 0
        %366 = vmatpush2.bf16.msra.mxu0 0
        %367 = vmatprep.subr.bf16.mxu0 0
        %368 = vmatpush2.bf16.msra.mxu0 0
        %369 = vmatprep.subr.bf16.mxu0 %v313
        %370 = vmatpush2.bf16.msra.mxu0 %v312
        %371 = vmatprep.mubr.bf16.mxu0 %v337
        %372 = vmatmul.mubr.bf16.gmra.mxu0 %v332
        %v373 = vpop.f32.mrf.mxu0
        %v374 = vadd.f32 %v319, %v373
        %v375 = vpop.f32.mrf.mxu0
        %v376 = vadd.f32 %v319, %v375
        %v377 = vpop.f32.mrf.mxu0
        %v378 = vadd.f32 %v324, %v377
        %v379 = vpop.f32.mrf.mxu0
        %v380 = vadd.f32 %v324, %v379
        %381 = vdwg.mxu0
        %v382 = vsub.f32 0.0, %v374
        %v383 = vsub.f32 0.0, %v376
        %v384 = vsub.f32 0.0, %v378
        %v385 = vsub.f32 0.0, %v380
        %v386 = vmul.f32 %v382, 1.442695
        %v387 = vpow.pop %v386
        %v388 = vmul.f32 %v383, 1.442695
        %v389 = vpow.pop %v388
        %v390 = vmul.f32 %v384, 1.442695
        %v391 = vpow.pop %v390
        %v392 = vmul.f32 %v385, 1.442695
        %v393 = vpow.pop %v392
        %v394 = vadd.f32 %v387, 1.0
        %v395 = vadd.f32 %v389, 1.0
        %v396 = vadd.f32 %v391, 1.0
        %v397 = vadd.f32 %v393, 1.0
        %v398 = vrcp.pop %v394
        %v399 = vrcp.pop %v395
        %v400 = vrcp.pop %v396
        %v401 = vrcp.pop %v397
        %v402 = vmul.f32 %v374, %v398
        %v403 = vmul.f32 %v376, %v399
        %v404 = vmul.f32 %v378, %v400
        %v405 = vmul.f32 %v380, %v401
        %406 = vst [vmem:[%s254] sm:$0xff] %v402
        %407 = vst [vmem:[%s254 + $0x8] sm:$0xff] %v403
        %408 = vst [vmem:[%s254 + $0x10] sm:$0xff] %v404
        %409 = vst [vmem:[%s254 + $0x18] sm:$0xff] %v405
        %s410 = sand.u32 %s90, 1
        %s411 = sand.u32 %s90, 1
        %s412 = smul.addr %s411, 32
        %s413 = scalar_lea.vmem [#allocation3], %s412
        // Predicated region
        $region56: #{rotation_net_forward.7} parent=50 // pred_check
          %p414 = pneg %p100
        $region57: #{rotation_net_forward.7} parent=50 // pred_check_branch
          %416 = sbr.rel (%p414) target = $region59
        $region58: #{rotation_net_forward.7} parent=50 // pred_region
          %s417 = smul.u32 2, %s14
          %s418 = smul.addr %s417, 8
          %s419 = scalar_lea.vmem %s3, %s418
          // Predicated region
          $region60: #{rotation_net_forward.7} parent=58 // pred_check
            _
          $region61: #{rotation_net_forward.7} parent=58 // pred_check_branch
            %421 = sbr.rel (0) target = $region63
          $region62: #{rotation_net_forward.7} parent=58 // pred_region
            // Predicated region
            $region64: #{rotation_net_forward.7} parent=62 // pred_check
              _
            $region65: #{rotation_net_forward.7} parent=62 // pred_check_branch
              %423 = sbr.rel (0) target = $region67
            $region66: #{rotation_net_forward.7} parent=62 // pred_region
              loop: start=0, step=1, limit=1
              $region68: #{rotation_net_forward.7} parent=66 // loop_pre_header
                _
              $region69: #{rotation_net_forward.7} parent=66 // loop_header
                %s425 = sphi 0, %s429
                %p426 = scmp.ge.s32.totalorder %s425, 1
                %s430 = sphi %s413, %s413
                %s431 = sphi %s419, %s419
              $region70: #{rotation_net_forward.7} parent=66 // loop_header_branch
                %428 = sbr.rel (%p426) target = $region74
              $region71: #{rotation_net_forward.7} parent=66 // loop_body
                %v432 = vld [vmem:[%s430] sm:$0xff]
                %433 = vst [vmem:[%s431] sm:$0xff] %v432
                %v434 = vld [vmem:[%s430 + $0x8] sm:$0xff]
                %435 = vst [vmem:[%s431 + $0x8] sm:$0xff] %v434
                %v436 = vld [vmem:[%s430 + $0x10] sm:$0xff]
                %437 = vst [vmem:[%s431 + $0x20] sm:$0xff] %v436
                %v438 = vld [vmem:[%s430 + $0x18] sm:$0xff]
                %439 = vst [vmem:[%s431 + $0x28] sm:$0xff] %v438
              $region72: #{rotation_net_forward.7} parent=66 // loop_footer
                %s429 = sadd.s32 1, %s425
              $region73: #{rotation_net_forward.7} parent=66 // loop_footer_branch
                %424 = sbr.rel target = $region69
              $region74: #{rotation_net_forward.7} parent=66 // loop_exit
                _
            $region67: #{rotation_net_forward.7} parent=62 // pred_fallthru
              _
            // Predicated region
            $region75: #{rotation_net_forward.7} parent=62 // pred_check
              _
            $region76: #{rotation_net_forward.7} parent=62 // pred_check_branch
              %441 = sbr.rel target = $region78
            $region77: #{rotation_net_forward.7} parent=62 // pred_region
              _
            $region78: #{rotation_net_forward.7} parent=62 // pred_fallthru
              _
          $region63: #{rotation_net_forward.7} parent=58 // pred_fallthru
            _
          %442 = vnop
        $region59: #{rotation_net_forward.7} parent=50 // pred_fallthru
          _
      $region51: #{rotation_net_forward.7} parent=5 // pred_fallthru
        _
      %p443 = scmp.le.s32.totalorder 2, %s9
      // Predicated region
      $region79: #{rotation_net_forward.7} parent=5 // pred_check
        %p444 = pneg %p443
      $region80: #{rotation_net_forward.7} parent=5 // pred_check_branch
        %446 = sbr.rel (%p444) target = $region82
      $region81: #{rotation_net_forward.7} parent=5 // pred_region
        %s447 = ssub.s32 %s9, 2
        // Predicated region
        $region83: #{rotation_net_forward.7} parent=81 // pred_check
          %p448 = pneg %p106
        $region84: #{rotation_net_forward.7} parent=81 // pred_check_branch
          %450 = sbr.rel (%p448) target = $region86
        $region85: #{rotation_net_forward.7} parent=81 // pred_region
          %s451 = sand.u32 %s91, 1
          %s452 = sand.u32 %s91, 1
          %s453 = smul.addr %s452, 32
          %s454 = scalar_lea.vmem [#allocation3], %s453
        $region86: #{rotation_net_forward.7} parent=81 // pred_fallthru
          _
      $region82: #{rotation_net_forward.7} parent=5 // pred_fallthru
        _
    $region6: #{rotation_net_forward.7} parent=1 // loop_footer
      %s13 = sadd.s32 1, %s9
    $region7: #{rotation_net_forward.7} parent=1 // loop_footer_branch
      %8 = sbr.rel target = $region3
    $region8: #{rotation_net_forward.7} parent=1 // loop_exit
      _

// kernel: rotation_net_forward.8
$region0: #{rotation_net_forward.8}
  #allocation0 [shape = 'u32[]', space=smem, size = 0x4, offset = 0x4, fixed_abs, tag = 'smem constant byte address 0x4 - core index']
  #allocation1 [shape = 'u32[144,128]{1,0:T(1,128)}', space=vmem, size = 0x12000, scoped, tag = 'internal scratch']
  %s0 = inlined_call_operand.vmem [shape: bf16[8,144], index: 0, kind: input, shape index: {}]
  %s1 = inlined_call_operand.vmem [shape: f32[144,512], index: 1, kind: input, shape index: {}]
  %s2 = inlined_call_operand.vmem [shape: f32[8,1], index: 2, kind: input, shape index: {}]
  %s3 = inlined_call_operand.vmem [shape: f32[8,512], index: 3, kind: output, shape index: {}]
  %s4 = sld [smem:[#allocation0]]
  $region68: #{rotation_net_forward.8} parent=0
    _
  %s6 = ssub.s32 1, %s4
  %s7 = scalar_select 0, %s6, %s4
  $region1: #{rotation_net_forward.8} parent=0
    #allocation2 [shape = 'u8[294912]{0}', space=vmem, size = 0x48000, scoped, tag = 'input window, operand 1']
    loop: start=0, step=1, limit=4
    $region2: #{rotation_net_forward.8} parent=1 // loop_pre_header
      _
    $region3: #{rotation_net_forward.8} parent=1 // loop_header
      %s9 = sphi 0, %s13
      %p10 = scmp.ge.s32.totalorder %s9, 4
      %s17 = sphi 0, %s17
      %s19 = sphi 0, %s17
      %s20 = sphi 0, %s19
      %s34 = sphi 0, %s20
      %s40 = sphi 0, %s42
      %s43 = sphi 0, %s40
      %s44 = sphi 0, %s43
      %s60 = sphi 0, %s44
      %s64 = sphi 0, %s64
      %s66 = sphi 0, %s64
      %s67 = sphi 0, %s66
      %s81 = sphi 0, %s67
      %s87 = sphi 0, %s89
      %s90 = sphi 0, %s87
      %s91 = sphi 0, %s90
      %s107 = sphi 0, %s91
    $region4: #{rotation_net_forward.8} parent=1 // loop_header_branch
      %12 = sbr.rel (%p10) target = $region8
    $region5: #{rotation_net_forward.8} parent=1 // loop_body
      %s14 = ssub.s32 %s9, 1
      %s15 = ssub.s32 %s9, 2
      %s16 = sadd.s32 %s9, 1
      %s18 = sadd.s32 %s17, 1
      %p21 = scmp.eq.s32.totalorder %s9, 1
      %p22 = scmp.ne.s32.totalorder %s17, %s19
      %p23 = scmp.eq.s32.totalorder %s9, 0
      %p24 = por %p22, %p23
      %p25 = scmp.ne.s32.totalorder %s17, %s19
      %p26 = scmp.eq.s32.totalorder %s14, 1
      %p27 = por %p25, %p26
      %p28 = scmp.ne.s32.totalorder %s19, %s20
      %p29 = scmp.eq.s32.totalorder %s14, 0
      %p30 = por %p28, %p29
      %p31 = scmp.ne.s32.totalorder %s19, %s20
      %p32 = scmp.eq.s32.totalorder %s15, 1
      %p33 = por %p31, %p32
      %p35 = scmp.ne.s32.totalorder %s20, %s34
      %p36 = scmp.eq.s32.totalorder %s15, 0
      %p37 = por %p35, %p36
      %s38 = ssub.s32 %s9, %s16
      %p39 = scmp.eq.s32.totalorder %s38, 0
      %s41 = sadd.s32 %s40, 1
      %s42 = scalar_select %p39, %s40, %s41
      %p45 = pneg %p39
      %p46 = scmp.eq.s32.totalorder %s9, 1
      %p47 = por %p45, %p46
      %p48 = scmp.ne.s32.totalorder %s40, %s43
      %p49 = scmp.eq.s32.totalorder %s9, 0
      %p50 = por %p48, %p49
      %p51 = scmp.ne.s32.totalorder %s40, %s43
      %p52 = scmp.eq.s32.totalorder %s14, 1
      %p53 = por %p51, %p52
      %p54 = scmp.ne.s32.totalorder %s43, %s44
      %p55 = scmp.eq.s32.totalorder %s14, 0
      %p56 = por %p54, %p55
      %p57 = scmp.ne.s32.totalorder %s43, %s44
      %p58 = scmp.eq.s32.totalorder %s15, 1
      %p59 = por %p57, %p58
      %p61 = scmp.ne.s32.totalorder %s44, %s60
      %p62 = scmp.eq.s32.totalorder %s15, 0
      %p63 = por %p61, %p62
      %s65 = sadd.s32 %s64, 1
      %p68 = scmp.eq.s32.totalorder %s9, 1
      %p69 = scmp.ne.s32.totalorder %s64, %s66
      %p70 = scmp.eq.s32.totalorder %s9, 0
      %p71 = por %p69, %p70
      %p72 = scmp.ne.s32.totalorder %s64, %s66
      %p73 = scmp.eq.s32.totalorder %s14, 1
      %p74 = por %p72, %p73
      %p75 = scmp.ne.s32.totalorder %s66, %s67
      %p76 = scmp.eq.s32.totalorder %s14, 0
      %p77 = por %p75, %p76
      %p78 = scmp.ne.s32.totalorder %s66, %s67
      %p79 = scmp.eq.s32.totalorder %s15, 1
      %p80 = por %p78, %p79
      %p82 = scmp.ne.s32.totalorder %s67, %s81
      %p83 = scmp.eq.s32.totalorder %s15, 0
      %p84 = por %p82, %p83
      %s85 = ssub.s32 %s9, %s16
      %p86 = scmp.eq.s32.totalorder %s85, 0
      %s88 = sadd.s32 %s87, 1
      %s89 = scalar_select %p86, %s87, %s88
      %p92 = pneg %p86
      %p93 = scmp.eq.s32.totalorder %s9, 1
      %p94 = por %p92, %p93
      %p95 = scmp.ne.s32.totalorder %s87, %s90
      %p96 = scmp.eq.s32.totalorder %s9, 0
      %p97 = por %p95, %p96
      %p98 = scmp.ne.s32.totalorder %s87, %s90
      %p99 = scmp.eq.s32.totalorder %s14, 1
      %p100 = por %p98, %p99
      %p101 = scmp.ne.s32.totalorder %s90, %s91
      %p102 = scmp.eq.s32.totalorder %s14, 0
      %p103 = por %p101, %p102
      %p104 = scmp.ne.s32.totalorder %s90, %s91
      %p105 = scmp.eq.s32.totalorder %s15, 1
      %p106 = por %p104, %p105
      %p108 = scmp.ne.s32.totalorder %s91, %s107
      %p109 = scmp.eq.s32.totalorder %s15, 0
      %p110 = por %p108, %p109
      %p111 = scmp.le.s32.totalorder 1, %s9
      %p112 = scmp.lt.s32.totalorder %s9, 3
      %p113 = pnand %p111, %p112
      %p114 = pneg %p113
      // Predicated region
      $region9: #{rotation_net_forward.8} parent=5 // pred_check
        _
      $region10: #{rotation_net_forward.8} parent=5 // pred_check_branch
        %116 = sbr.rel (%p113) target = $region12
      $region11: #{rotation_net_forward.8} parent=5 // pred_region
        %s117 = ssub.s32 %s9, 1
        // Predicated region
        $region13: #{rotation_net_forward.8} parent=11 // pred_check
          %p118 = pneg %p30
        $region14: #{rotation_net_forward.8} parent=11 // pred_check_branch
          %120 = sbr.rel (%p118) target = $region16
        $region15: #{rotation_net_forward.8} parent=11 // pred_region
          _
        $region16: #{rotation_net_forward.8} parent=11 // pred_fallthru
          _
        // Predicated region
        $region17: #{rotation_net_forward.8} parent=11 // pred_check
          %p121 = pneg %p77
        $region18: #{rotation_net_forward.8} parent=11 // pred_check_branch
          %123 = sbr.rel (%p121) target = $region20
        $region19: #{rotation_net_forward.8} parent=11 // pred_region
          _
        $region20: #{rotation_net_forward.8} parent=11 // pred_fallthru
          _
      $region12: #{rotation_net_forward.8} parent=5 // pred_fallthru
        _
      %p124 = scmp.lt.s32.totalorder %s9, 2
      // Predicated region
      $region21: #{rotation_net_forward.8} parent=5 // pred_check
        %p125 = pneg %p124
      $region22: #{rotation_net_forward.8} parent=5 // pred_check_branch
        %127 = sbr.rel (%p125) target = $region24
      $region23: #{rotation_net_forward.8} parent=5 // pred_region
        // Predicated region
        $region25: #{rotation_net_forward.8} parent=23 // pred_check
          %p128 = pneg %p50
        $region26: #{rotation_net_forward.8} parent=23 // pred_check_branch
          %130 = sbr.rel (%p128) target = $region28
        $region27: #{rotation_net_forward.8} parent=23 // pred_region
          %s131 = sand.u32 %s40, 1
          %s132 = sand.u32 %s40, 1
          %s133 = smul.addr %s132, 288
          %s134 = scalar_lea.vmem [#allocation2], %s133
          %s135 = smul.u32 2, %s9
          %s136 = smul.addr %s135, 8
          %s137 = scalar_lea.vmem %s1, %s136
          // Predicated region
          $region29: #{rotation_net_forward.8} parent=27 // pred_check
            _
          $region30: #{rotation_net_forward.8} parent=27 // pred_check_branch
            %139 = sbr.rel (0) target = $region32
          $region31: #{rotation_net_forward.8} parent=27 // pred_region
            // Predicated region
            $region33: #{rotation_net_forward.8} parent=31 // pred_check
              _
            $region34: #{rotation_net_forward.8} parent=31 // pred_check_branch
              %141 = sbr.rel (0) target = $region36
            $region35: #{rotation_net_forward.8} parent=31 // pred_region
              loop: start=0, step=1, limit=1
              $region37: #{rotation_net_forward.8} parent=35 // loop_pre_header
                _
              $region38: #{rotation_net_forward.8} parent=35 // loop_header
                %s143 = sphi 0, %s147
                %p144 = scmp.ge.s32.totalorder %s143, 1
                %s148 = sphi %s137, %s137
                %s149 = sphi %s134, %s134
              $region39: #{rotation_net_forward.8} parent=35 // loop_header_branch
                %146 = sbr.rel (%p144) target = $region43
              $region40: #{rotation_net_forward.8} parent=35 // loop_body
                %v150 = vld [vmem:[%s148] sm:$0xff]
                %151 = vst [vmem:[%s149] sm:$0xff] %v150
                %v152 = vld [vmem:[%s148 + $0x8] sm:$0xff]
                %153 = vst [vmem:[%s149 + $0x8] sm:$0xff] %v152
                %v154 = vld [vmem:[%s148 + $0x20] sm:$0xff]
                %155 = vst [vmem:[%s149 + $0x10] sm:$0xff] %v154
                %v156 = vld [vmem:[%s148 + $0x28] sm:$0xff]
                %157 = vst [vmem:[%s149 + $0x18] sm:$0xff] %v156
                %v158 = vld [vmem:[%s148 + $0x40] sm:$0xff]
                %159 = vst [vmem:[%s149 + $0x20] sm:$0xff] %v158
                %v160 = vld [vmem:[%s148 + $0x48] sm:$0xff]
                %161 = vst [vmem:[%s149 + $0x28] sm:$0xff] %v160
                %v162 = vld [vmem:[%s148 + $0x60] sm:$0xff]
                %163 = vst [vmem:[%s149 + $0x30] sm:$0xff] %v162
                %v164 = vld [vmem:[%s148 + $0x68] sm:$0xff]
                %165 = vst [vmem:[%s149 + $0x38] sm:$0xff] %v164
                %v166 = vld [vmem:[%s148 + $0x80] sm:$0xff]
                %167 = vst [vmem:[%s149 + $0x40] sm:$0xff] %v166
                %v168 = vld [vmem:[%s148 + $0x88] sm:$0xff]
                %169 = vst [vmem:[%s149 + $0x48] sm:$0xff] %v168
                %v170 = vld [vmem:[%s148 + $0xa0] sm:$0xff]
                %171 = vst [vmem:[%s149 + $0x50] sm:$0xff] %v170
                %v172 = vld [vmem:[%s148 + $0xa8] sm:$0xff]
                %173 = vst [vmem:[%s149 + $0x58] sm:$0xff] %v172
                %v174 = vld [vmem:[%s148 + $0xc0] sm:$0xff]
                %175 = vst [vmem:[%s149 + $0x60] sm:$0xff] %v174
                %v176 = vld [vmem:[%s148 + $0xc8] sm:$0xff]
                %177 = vst [vmem:[%s149 + $0x68] sm:$0xff] %v176
                %v178 = vld [vmem:[%s148 + $0xe0] sm:$0xff]
                %179 = vst [vmem:[%s149 + $0x70] sm:$0xff] %v178
                %v180 = vld [vmem:[%s148 + $0xe8] sm:$0xff]
                %181 = vst [vmem:[%s149 + $0x78] sm:$0xff] %v180
                %v182 = vld [vmem:[%s148 + $0x100] sm:$0xff]
                %183 = vst [vmem:[%s149 + $0x80] sm:$0xff] %v182
                %v184 = vld [vmem:[%s148 + $0x108] sm:$0xff]
                %185 = vst [vmem:[%s149 + $0x88] sm:$0xff] %v184
                %v186 = vld [vmem:[%s148 + $0x120] sm:$0xff]
                %187 = vst [vmem:[%s149 + $0x90] sm:$0xff] %v186
                %v188 = vld [vmem:[%s148 + $0x128] sm:$0xff]
                %189 = vst [vmem:[%s149 + $0x98] sm:$0xff] %v188
                %v190 = vld [vmem:[%s148 + $0x140] sm:$0xff]
                %191 = vst [vmem:[%s149 + $0xa0] sm:$0xff] %v190
                %v192 = vld [vmem:[%s148 + $0x148] sm:$0xff]
                %193 = vst [vmem:[%s149 + $0xa8] sm:$0xff] %v192
                %v194 = vld [vmem:[%s148 + $0x160] sm:$0xff]
                %195 = vst [vmem:[%s149 + $0xb0] sm:$0xff] %v194
                %v196 = vld [vmem:[%s148 + $0x168] sm:$0xff]
                %197 = vst [vmem:[%s149 + $0xb8] sm:$0xff] %v196
                %v198 = vld [vmem:[%s148 + $0x180] sm:$0xff]
                %199 = vst [vmem:[%s149 + $0xc0] sm:$0xff] %v198
                %v200 = vld [vmem:[%s148 + $0x188] sm:$0xff]
                %201 = vst [vmem:[%s149 + $0xc8] sm:$0xff] %v200
                %v202 = vld [vmem:[%s148 + $0x1a0] sm:$0xff]
                %203 = vst [vmem:[%s149 + $0xd0] sm:$0xff] %v202
                %v204 = vld [vmem:[%s148 + $0x1a8] sm:$0xff]
                %205 = vst [vmem:[%s149 + $0xd8] sm:$0xff] %v204
                %v206 = vld [vmem:[%s148 + $0x1c0] sm:$0xff]
                %207 = vst [vmem:[%s149 + $0xe0] sm:$0xff] %v206
                %v208 = vld [vmem:[%s148 + $0x1c8] sm:$0xff]
                %209 = vst [vmem:[%s149 + $0xe8] sm:$0xff] %v208
                %v210 = vld [vmem:[%s148 + $0x1e0] sm:$0xff]
                %211 = vst [vmem:[%s149 + $0xf0] sm:$0xff] %v210
                %v212 = vld [vmem:[%s148 + $0x1e8] sm:$0xff]
                %213 = vst [vmem:[%s149 + $0xf8] sm:$0xff] %v212
                %v214 = vld [vmem:[%s148 + $0x200] sm:$0xff]
                %215 = vst [vmem:[%s149 + $0x100] sm:$0xff] %v214
                %v216 = vld [vmem:[%s148 + $0x208] sm:$0xff]
                %217 = vst [vmem:[%s149 + $0x108] sm:$0xff] %v216
                %v218 = vld [vmem:[%s148 + $0x220] sm:$0xff]
                %219 = vst [vmem:[%s149 + $0x110] sm:$0xff] %v218
                %v220 = vld [vmem:[%s148 + $0x228] sm:$0xff]
                %221 = vst [vmem:[%s149 + $0x118] sm:$0xff] %v220
              $region41: #{rotation_net_forward.8} parent=35 // loop_footer
                %s147 = sadd.s32 1, %s143
              $region42: #{rotation_net_forward.8} parent=35 // loop_footer_branch
                %142 = sbr.rel target = $region38
              $region43: #{rotation_net_forward.8} parent=35 // loop_exit
                _
            $region36: #{rotation_net_forward.8} parent=31 // pred_fallthru
              _
            // Predicated region
            $region44: #{rotation_net_forward.8} parent=31 // pred_check
              _
            $region45: #{rotation_net_forward.8} parent=31 // pred_check_branch
              %223 = sbr.rel target = $region47
            $region46: #{rotation_net_forward.8} parent=31 // pred_region
              _
            $region47: #{rotation_net_forward.8} parent=31 // pred_fallthru
              _
          $region32: #{rotation_net_forward.8} parent=27 // pred_fallthru
            _
          %224 = vnop
        $region28: #{rotation_net_forward.8} parent=23 // pred_fallthru
          _
      $region24: #{rotation_net_forward.8} parent=5 // pred_fallthru
        _
      %p225 = scmp.le.s32.totalorder 1, %s9
      %p226 = scmp.lt.s32.totalorder %s9, 3
      %p227 = pnand %p225, %p226
      %p228 = pneg %p227
      // Predicated region
      $region48: #{rotation_net_forward.8} parent=5 // pred_check
        _
      $region49: #{rotation_net_forward.8} parent=5 // pred_check_branch
        %230 = sbr.rel (%p227) target = $region51
      $region50: #{rotation_net_forward.8} parent=5 // pred_region
        %s231 = ssub.s32 %s9, 1
        %s232 = sand.u32 %s43, 1
        %s233 = sand.u32 %s43, 1
        %s234 = smul.addr %s233, 288
        %s235 = scalar_lea.vmem [#allocation2], %s234
        // Predicated region
        $region52: #{rotation_net_forward.8} parent=50 // pred_check
          %p236 = pneg %p56
        $region53: #{rotation_net_forward.8} parent=50 // pred_check_branch
          %238 = sbr.rel (%p236) target = $region55
        $region54: #{rotation_net_forward.8} parent=50 // pred_region
          _
        $region55: #{rotation_net_forward.8} parent=50 // pred_fallthru
          _
        %p239 = pneg %p30
        %p240 = pneg %p27
        %s241 = sand.u32 %s43, 1
        %s242 = sand.u32 %s43, 1
        %s243 = smul.addr %s242, 288
        %s244 = scalar_lea.vmem [#allocation2], %s243
        %p245 = pneg %p56
        %p246 = pneg %p53
        %p247 = pneg %p77
        %p248 = pneg %p74
        %p249 = pneg %p103
        %p250 = pneg %p100
        %s251 = smul.u32 2, %s14
        %p252 = scmp.lt.s32.totalorder %s251, 3
        %s253 = scalar_select %p252, %s251, 3
        %s254 = smul.addr %s253, 8
        %s255 = scalar_lea.vmem %s3, %s254
        %s256 = smul.u32 2, %s14
        %s257 = smul.u32 2, %s14
        %p258 = scmp.lt.s32.totalorder %s257, 3
        %s259 = scalar_select %p258, %s257, 3
        %s260 = smul.addr %s259, 8
        %s261 = scalar_lea.vmem %s3, %s260
        %s262 = smul.u32 2, %s14
        %v264 = vld [vmem:[%s0] sm:$0xff]
        %v265 = vld [vmem:[%s235] sm:$0xff]
        %v266 = vld [vmem:[%s235 + $0x8] sm:$0xff]
        %v267 = vld [vmem:[%s235 + $0x10] sm:$0xff]
        %v268 = vld [vmem:[%s235 + $0x18] sm:$0xff]
        %v269 = vld [vmem:[%s235 + $0x20] sm:$0xff]
        %v270 = vld [vmem:[%s235 + $0x28] sm:$0xff]
        %v271 = vld [vmem:[%s235 + $0x30] sm:$0xff]
        %v272 = vld [vmem:[%s235 + $0x38] sm:$0xff]
        %v273 = vld [vmem:[%s235 + $0x40] sm:$0xff]
        %v274 = vld [vmem:[%s235 + $0x48] sm:$0xff]
        %v275 = vld [vmem:[%s235 + $0x50] sm:$0xff]
        %v276 = vld [vmem:[%s235 + $0x58] sm:$0xff]
        %v277 = vld [vmem:[%s235 + $0x60] sm:$0xff]
        %v278 = vld [vmem:[%s235 + $0x68] sm:$0xff]
        %v279 = vld [vmem:[%s235 + $0x70] sm:$0xff]
        %v280 = vld [vmem:[%s235 + $0x78] sm:$0xff]
        %v281 = vld [vmem:[%s235 + $0x80] sm:$0xff]
        %v282 = vld [vmem:[%s235 + $0x88] sm:$0xff]
        %v283 = vld [vmem:[%s235 + $0x90] sm:$0xff]
        %v284 = vld [vmem:[%s235 + $0x98] sm:$0xff]
        %v285 = vld [vmem:[%s235 + $0xa0] sm:$0xff]
        %v286 = vld [vmem:[%s235 + $0xa8] sm:$0xff]
        %v287 = vld [vmem:[%s235 + $0xb0] sm:$0xff]
        %v288 = vld [vmem:[%s235 + $0xb8] sm:$0xff]
        %v289 = vld [vmem:[%s235 + $0xc0] sm:$0xff]
        %v290 = vld [vmem:[%s235 + $0xc8] sm:$0xff]
        %v291 = vld [vmem:[%s235 + $0xd0] sm:$0xff]
        %v292 = vld [vmem:[%s235 + $0xd8] sm:$0xff]
        %v293 = vld [vmem:[%s235 + $0xe0] sm:$0xff]
        %v294 = vld [vmem:[%s235 + $0xe8] sm:$0xff]
        %v295 = vld [vmem:[%s235 + $0xf0] sm:$0xff]
        %v296 = vld [vmem:[%s235 + $0xf8] sm:$0xff]
        %v297 = vld [vmem:[%s235 + $0x100] sm:$0xff]
        %v298 = vld [vmem:[%s235 + $0x108] sm:$0xff]
        %v299 = vld [vmem:[%s235 + $0x110] sm:$0xff]
        %v300 = vld [vmem:[%s235 + $0x118] sm:$0xff]
        %v301 = vpack.c.bf16 %v267, %v265
        %v302 = vpack.c.bf16 %v268, %v266
        %v303 = vpack.c.bf16 %v271, %v269
        %v304 = vpack.c.bf16 %v272, %v270
        %v305 = vpack.c.bf16 %v275, %v273
        %v306 = vpack.c.bf16 %v276, %v274
        %v307 = vpack.c.bf16 %v279, %v277
        %v308 = vpack.c.bf16 %v280, %v278
        %v309 = vpack.c.bf16 %v283, %v281
        %v310 = vpack.c.bf16 %v284, %v282
        %v311 = vpack.c.bf16 %v287, %v285
        %v312 = vpack.c.bf16 %v288, %v286
        %v313 = vpack.c.bf16 %v291, %v289
        %v314 = vpack.c.bf16 %v292, %v290
        %v315 = vpack.c.bf16 %v295, %v293
        %v316 = vpack.c.bf16 %v296, %v294
        %v317 = vpack.c.bf16 %v299, %v297
        %v318 = vpack.c.bf16 %v300, %v298
        %v319 = vld [vmem:[%s2] sm:$0xff]
        %321 = vset.pattern.permute.xlu0 0
        %322 = vperm.xlu0 %321, %v319
        %v323 = vpop.permute.xlu0 %322
        %v326 = vunpack.c.l.b16 %v264
        %v327 = vunpack.c.h.b16 %v264
        %v328 = vpack.c.b16 %v326, %v326
        %v329 = vpack.c.b16 %v327, %v327
        %vm331 = vcmask 130048
        %v333 = vsel %vm331, %v329, 0
        %335 = vmatprep.subr.bf16.mxu0 %v316
        %336 = vmatpush1.bf16.msra.mxu0 %v315
        %337 = vmatprep.subr.bf16.mxu0 %v314
        %338 = vmatpush1.bf16.msra.mxu0 %v313
        %339 = vmatprep.subr.bf16.mxu0 %v312
        %340 = vmatpush1.bf16.msra.mxu0 %v311
        %341 = vmatprep.subr.bf16.mxu0 %v310
        %342 = vmatpush1.bf16.msra.mxu0 %v309
        %343 = vmatprep.subr.bf16.mxu0 %v308
        %344 = vmatpush1.bf16.msra.mxu0 %v307
        %345 = vmatprep.subr.bf16.mxu0 %v306
        %346 = vmatpush1.bf16.msra.mxu0 %v305
        %347 = vmatprep.subr.bf16.mxu0 %v304
        %348 = vmatpush1.bf16.msra.mxu0 %v303
        %349 = vmatprep.subr.bf16.mxu0 %v302
        %350 = vmatpush1.bf16.msra.mxu0 %v301
        %351 = vmatprep.subr.bf16.mxu0 0
        %352 = vmatpush2.bf16.msra.mxu0 0
        %353 = vmatprep.subr.bf16.mxu0 0
        %354 = vmatpush2.bf16.msra.mxu0 0
        %355 = vmatprep.subr.bf16.mxu0 0
        %356 = vmatpush2.bf16.msra.mxu0 0
        %357 = vmatprep.subr.bf16.mxu0 0
        %358 = vmatpush2.bf16.msra.mxu0 0
        %359 = vmatprep.subr.bf16.mxu0 0
        %360 = vmatpush2.bf16.msra.mxu0 0
        %361 = vmatprep.subr.bf16.mxu0 0
        %362 = vmatpush2.bf16.msra.mxu0 0
        %363 = vmatprep.subr.bf16.mxu0 0
        %364 = vmatpush2.bf16.msra.mxu0 0
        %365 = vmatprep.subr.bf16.mxu0 %v318
        %366 = vmatpush2.bf16.msra.mxu0 %v317
        %367 = vmatprep.mubr.bf16.mxu0 %v333
        %368 = vmatmul.mubr.bf16.gmra.mxu0 %v328
        %v369 = vpop.f32.mrf.mxu0
        %v370 = vadd.f32 %v323, %v369
        %v371 = vpop.f32.mrf.mxu0
        %v372 = vadd.f32 %v323, %v371
        %v373 = vpop.f32.mrf.mxu0
        %v374 = vpop.f32.mrf.mxu0
        %375 = vdwg.mxu0
        %376 = vst [vmem:[%s261] sm:$0xff] %v370
        %377 = vst [vmem:[%s261 + $0x8] sm:$0xff] %v372
        %s378 = smul.u32 2, %s14
        %p379 = scmp.lt.s32.totalorder %s378, 3
        %s380 = scalar_select %p379, %s378, 3
        %s381 = smul.addr %s380, 8
        %s382 = scalar_lea.vmem %s3, %s381
        // Predicated region
        $region56: #{rotation_net_forward.8} parent=50 // pred_check
          %p383 = pneg %p100
        $region57: #{rotation_net_forward.8} parent=50 // pred_check_branch
          %385 = sbr.rel (%p383) target = $region59
        $region58: #{rotation_net_forward.8} parent=50 // pred_region
          %s386 = smul.u32 2, %s14
        $region59: #{rotation_net_forward.8} parent=50 // pred_fallthru
          _
      $region51: #{rotation_net_forward.8} parent=5 // pred_fallthru
        _
      %p387 = scmp.le.s32.totalorder 2, %s9
      // Predicated region
      $region60: #{rotation_net_forward.8} parent=5 // pred_check
        %p388 = pneg %p387
      $region61: #{rotation_net_forward.8} parent=5 // pred_check_branch
        %390 = sbr.rel (%p388) target = $region63
      $region62: #{rotation_net_forward.8} parent=5 // pred_region
        %s391 = ssub.s32 %s9, 2
        // Predicated region
        $region64: #{rotation_net_forward.8} parent=62 // pred_check
          %p392 = pneg %p106
        $region65: #{rotation_net_forward.8} parent=62 // pred_check_branch
          %394 = sbr.rel (%p392) target = $region67
        $region66: #{rotation_net_forward.8} parent=62 // pred_region
          %s395 = smul.u32 2, %s15
          %p396 = scmp.lt.s32.totalorder %s395, 3
          %s397 = scalar_select %p396, %s395, 3
          %s398 = smul.addr %s397, 8
          %s399 = scalar_lea.vmem %s3, %s398
        $region67: #{rotation_net_forward.8} parent=62 // pred_fallthru
          _
      $region63: #{rotation_net_forward.8} parent=5 // pred_fallthru
        _
    $region6: #{rotation_net_forward.8} parent=1 // loop_footer
      %s13 = sadd.s32 1, %s9
    $region7: #{rotation_net_forward.8} parent=1 // loop_footer_branch
      %8 = sbr.rel target = $region3
    $region8: #{rotation_net_forward.8} parent=1 // loop_exit
      _

// kernel: rotation_net_forward.10
$region0: #{rotation_net_forward.10}
  #allocation0 [shape = 'u32[]', space=smem, size = 0x4, offset = 0x4, fixed_abs, tag = 'smem constant byte address 0x4 - core index']
  #allocation1 [shape = 'u32[144,128]{1,0:T(1,128)}', space=vmem, size = 0x12000, scoped, tag = 'internal scratch']
  %s0 = inlined_call_operand.vmem [shape: bf16[8,72], index: 0, kind: input, shape index: {}]
  %s1 = inlined_call_operand.vmem [shape: f32[72,512], index: 1, kind: input, shape index: {}]
  %s2 = inlined_call_operand.vmem [shape: f32[8,512], index: 2, kind: input, shape index: {}]
  %s3 = inlined_call_operand.vmem [shape: f32[8,512], index: 3, kind: input, shape index: {}, may-alias: {3,4}]
  %s4 = inlined_call_operand.vmem [shape: f32[8,512], index: 4, kind: output, shape index: {}, may-alias: {3,4}]
  %s5 = sld [smem:[#allocation0]]
  $region72: #{rotation_net_forward.10} parent=0
    _
  %s7 = ssub.s32 1, %s5
  %s8 = scalar_select 0, %s7, %s5
  $region1: #{rotation_net_forward.10} parent=0
    #allocation2 [shape = 'u8[147456]{0}', space=vmem, size = 0x24000, scoped, tag = 'input window, operand 1']
    loop: start=0, step=1, limit=4
    $region2: #{rotation_net_forward.10} parent=1 // loop_pre_header
      _
    $region3: #{rotation_net_forward.10} parent=1 // loop_header
      %s10 = sphi 0, %s14
      %p11 = scmp.ge.s32.totalorder %s10, 4
      %s18 = sphi 0, %s18
      %s20 = sphi 0, %s18
      %s21 = sphi 0, %s20
      %s35 = sphi 0, %s21
      %s41 = sphi 0, %s43
      %s44 = sphi 0, %s41
      %s45 = sphi 0, %s44
      %s61 = sphi 0, %s45
      %s67 = sphi 0, %s69
      %s70 = sphi 0, %s67
      %s71 = sphi 0, %s70
      %s87 = sphi 0, %s71
      %s93 = sphi 0, %s95
      %s96 = sphi 0, %s93
      %s97 = sphi 0, %s96
      %s113 = sphi 0, %s97
      %s119 = sphi 0, %s121
      %s122 = sphi 0, %s119
      %s123 = sphi 0, %s122
      %s139 = sphi 0, %s123
    $region4: #{rotation_net_forward.10} parent=1 // loop_header_branch
      %13 = sbr.rel (%p11) target = $region8
    $region5: #{rotation_net_forward.10} parent=1 // loop_body
      %s15 = ssub.s32 %s10, 1
      %s16 = ssub.s32 %s10, 2
      %s17 = sadd.s32 %s10, 1
      %s19 = sadd.s32 %s18, 1
      %p22 = scmp.eq.s32.totalorder %s10, 1
      %p23 = scmp.ne.s32.totalorder %s18, %s20
      %p24 = scmp.eq.s32.totalorder %s10, 0
      %p25 = por %p23, %p24
      %p26 = scmp.ne.s32.totalorder %s18, %s20
      %p27 = scmp.eq.s32.totalorder %s15, 1
      %p28 = por %p26, %p27
      %p29 = scmp.ne.s32.totalorder %s20, %s21
      %p30 = scmp.eq.s32.totalorder %s15, 0
      %p31 = por %p29, %p30
      %p32 = scmp.ne.s32.totalorder %s20, %s21
      %p33 = scmp.eq.s32.totalorder %s16, 1
      %p34 = por %p32, %p33
      %p36 = scmp.ne.s32.totalorder %s21, %s35
      %p37 = scmp.eq.s32.totalorder %s16, 0
      %p38 = por %p36, %p37
      %s39 = ssub.s32 %s10, %s17
      %p40 = scmp.eq.s32.totalorder %s39, 0
      %s42 = sadd.s32 %s41, 1
      %s43 = scalar_select %p40, %s41, %s42
      %p46 = pneg %p40
      %p47 = scmp.eq.s32.totalorder %s10, 1
      %p48 = por %p46, %p47
      %p49 = scmp.ne.s32.totalorder %s41, %s44
      %p50 = scmp.eq.s32.totalorder %s10, 0
      %p51 = por %p49, %p50
      %p52 = scmp.ne.s32.totalorder %s41, %s44
      %p53 = scmp.eq.s32.totalorder %s15, 1
      %p54 = por %p52, %p53
      %p55 = scmp.ne.s32.totalorder %s44, %s45
      %p56 = scmp.eq.s32.totalorder %s15, 0
      %p57 = por %p55, %p56
      %p58 = scmp.ne.s32.totalorder %s44, %s45
      %p59 = scmp.eq.s32.totalorder %s16, 1
      %p60 = por %p58, %p59
      %p62 = scmp.ne.s32.totalorder %s45, %s61
      %p63 = scmp.eq.s32.totalorder %s16, 0
      %p64 = por %p62, %p63
      %s65 = ssub.s32 %s10, %s17
      %p66 = scmp.eq.s32.totalorder %s65, 0
      %s68 = sadd.s32 %s67, 1
      %s69 = scalar_select %p66, %s67, %s68
      %p72 = pneg %p66
      %p73 = scmp.eq.s32.totalorder %s10, 1
      %p74 = por %p72, %p73
      %p75 = scmp.ne.s32.totalorder %s67, %s70
      %p76 = scmp.eq.s32.totalorder %s10, 0
      %p77 = por %p75, %p76
      %p78 = scmp.ne.s32.totalorder %s67, %s70
      %p79 = scmp.eq.s32.totalorder %s15, 1
      %p80 = por %p78, %p79
      %p81 = scmp.ne.s32.totalorder %s70, %s71
      %p82 = scmp.eq.s32.totalorder %s15, 0
      %p83 = por %p81, %p82
      %p84 = scmp.ne.s32.totalorder %s70, %s71
      %p85 = scmp.eq.s32.totalorder %s16, 1
      %p86 = por %p84, %p85
      %p88 = scmp.ne.s32.totalorder %s71, %s87
      %p89 = scmp.eq.s32.totalorder %s16, 0
      %p90 = por %p88, %p89
      %s91 = ssub.s32 %s10, %s17
      %p92 = scmp.eq.s32.totalorder %s91, 0
      %s94 = sadd.s32 %s93, 1
      %s95 = scalar_select %p92, %s93, %s94
      %p98 = pneg %p92
      %p99 = scmp.eq.s32.totalorder %s10, 1
      %p100 = por %p98, %p99
      %p101 = scmp.ne.s32.totalorder %s93, %s96
      %p102 = scmp.eq.s32.totalorder %s10, 0
      %p103 = por %p101, %p102
      %p104 = scmp.ne.s32.totalorder %s93, %s96
      %p105 = scmp.eq.s32.totalorder %s15, 1
      %p106 = por %p104, %p105
      %p107 = scmp.ne.s32.totalorder %s96, %s97
      %p108 = scmp.eq.s32.totalorder %s15, 0
      %p109 = por %p107, %p108
      %p110 = scmp.ne.s32.totalorder %s96, %s97
      %p111 = scmp.eq.s32.totalorder %s16, 1
      %p112 = por %p110, %p111
      %p114 = scmp.ne.s32.totalorder %s97, %s113
      %p115 = scmp.eq.s32.totalorder %s16, 0
      %p116 = por %p114, %p115
      %s117 = ssub.s32 %s10, %s17
      %p118 = scmp.eq.s32.totalorder %s117, 0
      %s120 = sadd.s32 %s119, 1
      %s121 = scalar_select %p118, %s119, %s120
      %p124 = pneg %p118
      %p125 = scmp.eq.s32.totalorder %s10, 1
      %p126 = por %p124, %p125
      %p127 = scmp.ne.s32.totalorder %s119, %s122
      %p128 = scmp.eq.s32.totalorder %s10, 0
      %p129 = por %p127, %p128
      %p130 = scmp.ne.s32.totalorder %s119, %s122
      %p131 = scmp.eq.s32.totalorder %s15, 1
      %p132 = por %p130, %p131
      %p133 = scmp.ne.s32.totalorder %s122, %s123
      %p134 = scmp.eq.s32.totalorder %s15, 0
      %p135 = por %p133, %p134
      %p136 = scmp.ne.s32.totalorder %s122, %s123
      %p137 = scmp.eq.s32.totalorder %s16, 1
      %p138 = por %p136, %p137
      %p140 = scmp.ne.s32.totalorder %s123, %s139
      %p141 = scmp.eq.s32.totalorder %s16, 0
      %p142 = por %p140, %p141
      %p143 = scmp.le.s32.totalorder 1, %s10
      %p144 = scmp.lt.s32.totalorder %s10, 3
      %p145 = pnand %p143, %p144
      %p146 = pneg %p145
      // Predicated region
      $region9: #{rotation_net_forward.10} parent=5 // pred_check
        _
      $region10: #{rotation_net_forward.10} parent=5 // pred_check_branch
        %148 = sbr.rel (%p145) target = $region12
      $region11: #{rotation_net_forward.10} parent=5 // pred_region
        %s149 = ssub.s32 %s10, 1
        // Predicated region
        $region13: #{rotation_net_forward.10} parent=11 // pred_check
          %p150 = pneg %p31
        $region14: #{rotation_net_forward.10} parent=11 // pred_check_branch
          %152 = sbr.rel (%p150) target = $region16
        $region15: #{rotation_net_forward.10} parent=11 // pred_region
          _
        $region16: #{rotation_net_forward.10} parent=11 // pred_fallthru
          _
      $region12: #{rotation_net_forward.10} parent=5 // pred_fallthru
        _
      %p153 = scmp.lt.s32.totalorder %s10, 2
      // Predicated region
      $region17: #{rotation_net_forward.10} parent=5 // pred_check
        %p154 = pneg %p153
      $region18: #{rotation_net_forward.10} parent=5 // pred_check_branch
        %156 = sbr.rel (%p154) target = $region20
      $region19: #{rotation_net_forward.10} parent=5 // pred_region
        // Predicated region
        $region21: #{rotation_net_forward.10} parent=19 // pred_check
          %p157 = pneg %p51
        $region22: #{rotation_net_forward.10} parent=19 // pred_check_branch
          %159 = sbr.rel (%p157) target = $region24
        $region23: #{rotation_net_forward.10} parent=19 // pred_region
          %s160 = sand.u32 %s41, 1
          %s161 = sand.u32 %s41, 1
          %s162 = smul.addr %s161, 144
          %s163 = scalar_lea.vmem [#allocation2], %s162
          %s164 = smul.u32 2, %s10
          %s165 = smul.addr %s164, 8
          %s166 = scalar_lea.vmem %s1, %s165
          // Predicated region
          $region25: #{rotation_net_forward.10} parent=23 // pred_check
            _
          $region26: #{rotation_net_forward.10} parent=23 // pred_check_branch
            %168 = sbr.rel (0) target = $region28
          $region27: #{rotation_net_forward.10} parent=23 // pred_region
            // Predicated region
            $region29: #{rotation_net_forward.10} parent=27 // pred_check
              _
            $region30: #{rotation_net_forward.10} parent=27 // pred_check_branch
              %170 = sbr.rel (0) target = $region32
            $region31: #{rotation_net_forward.10} parent=27 // pred_region
              loop: start=0, step=1, limit=1
              $region33: #{rotation_net_forward.10} parent=31 // loop_pre_header
                _
              $region34: #{rotation_net_forward.10} parent=31 // loop_header
                %s172 = sphi 0, %s176
                %p173 = scmp.ge.s32.totalorder %s172, 1
                %s177 = sphi %s166, %s166
                %s178 = sphi %s163, %s163
              $region35: #{rotation_net_forward.10} parent=31 // loop_header_branch
                %175 = sbr.rel (%p173) target = $region39
              $region36: #{rotation_net_forward.10} parent=31 // loop_body
                %v179 = vld [vmem:[%s177] sm:$0xff]
                %180 = vst [vmem:[%s178] sm:$0xff] %v179
                %v181 = vld [vmem:[%s177 + $0x8] sm:$0xff]
                %182 = vst [vmem:[%s178 + $0x8] sm:$0xff] %v181
                %v183 = vld [vmem:[%s177 + $0x20] sm:$0xff]
                %184 = vst [vmem:[%s178 + $0x10] sm:$0xff] %v183
                %v185 = vld [vmem:[%s177 + $0x28] sm:$0xff]
                %186 = vst [vmem:[%s178 + $0x18] sm:$0xff] %v185
                %v187 = vld [vmem:[%s177 + $0x40] sm:$0xff]
                %188 = vst [vmem:[%s178 + $0x20] sm:$0xff] %v187
                %v189 = vld [vmem:[%s177 + $0x48] sm:$0xff]
                %190 = vst [vmem:[%s178 + $0x28] sm:$0xff] %v189
                %v191 = vld [vmem:[%s177 + $0x60] sm:$0xff]
                %192 = vst [vmem:[%s178 + $0x30] sm:$0xff] %v191
                %v193 = vld [vmem:[%s177 + $0x68] sm:$0xff]
                %194 = vst [vmem:[%s178 + $0x38] sm:$0xff] %v193
                %v195 = vld [vmem:[%s177 + $0x80] sm:$0xff]
                %196 = vst [vmem:[%s178 + $0x40] sm:$0xff] %v195
                %v197 = vld [vmem:[%s177 + $0x88] sm:$0xff]
                %198 = vst [vmem:[%s178 + $0x48] sm:$0xff] %v197
                %v199 = vld [vmem:[%s177 + $0xa0] sm:$0xff]
                %200 = vst [vmem:[%s178 + $0x50] sm:$0xff] %v199
                %v201 = vld [vmem:[%s177 + $0xa8] sm:$0xff]
                %202 = vst [vmem:[%s178 + $0x58] sm:$0xff] %v201
                %v203 = vld [vmem:[%s177 + $0xc0] sm:$0xff]
                %204 = vst [vmem:[%s178 + $0x60] sm:$0xff] %v203
                %v205 = vld [vmem:[%s177 + $0xc8] sm:$0xff]
                %206 = vst [vmem:[%s178 + $0x68] sm:$0xff] %v205
                %v207 = vld [vmem:[%s177 + $0xe0] sm:$0xff]
                %208 = vst [vmem:[%s178 + $0x70] sm:$0xff] %v207
                %v209 = vld [vmem:[%s177 + $0xe8] sm:$0xff]
                %210 = vst [vmem:[%s178 + $0x78] sm:$0xff] %v209
                %v211 = vld [vmem:[%s177 + $0x100] sm:$0xff]
                %212 = vst [vmem:[%s178 + $0x80] sm:$0xff] %v211
                %v213 = vld [vmem:[%s177 + $0x108] sm:$0xff]
                %214 = vst [vmem:[%s178 + $0x88] sm:$0xff] %v213
              $region37: #{rotation_net_forward.10} parent=31 // loop_footer
                %s176 = sadd.s32 1, %s172
              $region38: #{rotation_net_forward.10} parent=31 // loop_footer_branch
                %171 = sbr.rel target = $region34
              $region39: #{rotation_net_forward.10} parent=31 // loop_exit
                _
            $region32: #{rotation_net_forward.10} parent=27 // pred_fallthru
              _
            // Predicated region
            $region40: #{rotation_net_forward.10} parent=27 // pred_check
              _
            $region41: #{rotation_net_forward.10} parent=27 // pred_check_branch
              %216 = sbr.rel target = $region43
            $region42: #{rotation_net_forward.10} parent=27 // pred_region
              _
            $region43: #{rotation_net_forward.10} parent=27 // pred_fallthru
              _
          $region28: #{rotation_net_forward.10} parent=23 // pred_fallthru
            _
          %217 = vnop
        $region24: #{rotation_net_forward.10} parent=19 // pred_fallthru
          _
        // Predicated region
        $region44: #{rotation_net_forward.10} parent=19 // pred_check
          %p218 = pneg %p77
        $region45: #{rotation_net_forward.10} parent=19 // pred_check_branch
          %220 = sbr.rel (%p218) target = $region47
        $region46: #{rotation_net_forward.10} parent=19 // pred_region
          %s221 = smul.u32 2, %s10
          %p222 = scmp.lt.s32.totalorder %s221, 3
          %s223 = scalar_select %p222, %s221, 3
          %s224 = smul.addr %s223, 8
          %s225 = scalar_lea.vmem %s2, %s224
          %s226 = smul.u32 2, %s10
        $region47: #{rotation_net_forward.10} parent=19 // pred_fallthru
          _
        // Predicated region
        $region48: #{rotation_net_forward.10} parent=19 // pred_check
          %p227 = pneg %p103
        $region49: #{rotation_net_forward.10} parent=19 // pred_check_branch
          %229 = sbr.rel (%p227) target = $region51
        $region50: #{rotation_net_forward.10} parent=19 // pred_region
          %s230 = smul.u32 2, %s10
          %p231 = scmp.lt.s32.totalorder %s230, 3
          %s232 = scalar_select %p231, %s230, 3
          %s233 = smul.addr %s232, 8
          %s234 = scalar_lea.vmem %s3, %s233
          %s235 = smul.u32 2, %s10
        $region51: #{rotation_net_forward.10} parent=19 // pred_fallthru
          _
      $region20: #{rotation_net_forward.10} parent=5 // pred_fallthru
        _
      %p236 = scmp.le.s32.totalorder 1, %s10
      %p237 = scmp.lt.s32.totalorder %s10, 3
      %p238 = pnand %p236, %p237
      %p239 = pneg %p238
      // Predicated region
      $region52: #{rotation_net_forward.10} parent=5 // pred_check
        _
      $region53: #{rotation_net_forward.10} parent=5 // pred_check_branch
        %241 = sbr.rel (%p238) target = $region55
      $region54: #{rotation_net_forward.10} parent=5 // pred_region
        %s242 = ssub.s32 %s10, 1
        %s243 = sand.u32 %s44, 1
        %s244 = sand.u32 %s44, 1
        %s245 = smul.addr %s244, 144
        %s246 = scalar_lea.vmem [#allocation2], %s245
        // Predicated region
        $region56: #{rotation_net_forward.10} parent=54 // pred_check
          %p247 = pneg %p57
        $region57: #{rotation_net_forward.10} parent=54 // pred_check_branch
          %249 = sbr.rel (%p247) target = $region59
        $region58: #{rotation_net_forward.10} parent=54 // pred_region
          _
        $region59: #{rotation_net_forward.10} parent=54 // pred_fallthru
          _
        %p250 = pneg %p31
        %p251 = pneg %p28
        %s252 = sand.u32 %s44, 1
        %s253 = sand.u32 %s44, 1
        %s254 = smul.addr %s253, 144
        %s255 = scalar_lea.vmem [#allocation2], %s254
        %p256 = pneg %p57
        %p257 = pneg %p54
        %s258 = smul.u32 2, %s15
        %p259 = scmp.lt.s32.totalorder %s258, 3
        %s260 = scalar_select %p259, %s258, 3
        %s261 = smul.addr %s260, 8
        %s262 = scalar_lea.vmem %s2, %s261
        %p263 = pneg %p83
        %p264 = pneg %p80
        %s265 = smul.u32 2, %s15
        %p266 = scmp.lt.s32.totalorder %s265, 3
        %s267 = scalar_select %p266, %s265, 3
        %s268 = smul.addr %s267, 8
        %s269 = scalar_lea.vmem %s3, %s268
        %p270 = pneg %p109
        %p271 = pneg %p106
        %p272 = pneg %p135
        %p273 = pneg %p132
        %s274 = smul.u32 2, %s15
        %p275 = scmp.lt.s32.totalorder %s274, 3
        %s276 = scalar_select %p275, %s274, 3
        %s277 = smul.addr %s276, 8
        %s278 = scalar_lea.vmem %s4, %s277
        %s279 = smul.u32 2, %s15
        %s280 = smul.u32 2, %s15
        %p281 = scmp.lt.s32.totalorder %s280, 3
        %s282 = scalar_select %p281, %s280, 3
        %s283 = smul.addr %s282, 8
        %s284 = scalar_lea.vmem %s2, %s283
        %s285 = smul.u32 2, %s15
        %s286 = smul.u32 2, %s15
        %p287 = scmp.lt.s32.totalorder %s286, 3
        %s288 = scalar_select %p287, %s286, 3
        %s289 = smul.addr %s288, 8
        %s290 = scalar_lea.vmem %s3, %s289
        %s291 = smul.u32 2, %s15
        %s292 = smul.u32 2, %s15
        %p293 = scmp.lt.s32.totalorder %s292, 3
        %s294 = scalar_select %p293, %s292, 3
        %s295 = smul.addr %s294, 8
        %s296 = scalar_lea.vmem %s4, %s295
        %s297 = smul.u32 2, %s15
        %v299 = vld [vmem:[%s0] sm:$0xf]
        %v300 = vld [vmem:[%s246] sm:$0xff]
        %v301 = vld [vmem:[%s246 + $0x8] sm:$0xff]
        %v302 = vld [vmem:[%s246 + $0x10] sm:$0xff]
        %v303 = vld [vmem:[%s246 + $0x18] sm:$0xff]
        %v304 = vld [vmem:[%s246 + $0x20] sm:$0xff]
        %v305 = vld [vmem:[%s246 + $0x28] sm:$0xff]
        %v306 = vld [vmem:[%s246 + $0x30] sm:$0xff]
        %v307 = vld [vmem:[%s246 + $0x38] sm:$0xff]
        %v308 = vld [vmem:[%s246 + $0x40] sm:$0xff]
        %v309 = vld [vmem:[%s246 + $0x48] sm:$0xff]
        %v310 = vld [vmem:[%s246 + $0x50] sm:$0xff]
        %v311 = vld [vmem:[%s246 + $0x58] sm:$0xff]
        %v312 = vld [vmem:[%s246 + $0x60] sm:$0xff]
        %v313 = vld [vmem:[%s246 + $0x68] sm:$0xff]
        %v314 = vld [vmem:[%s246 + $0x70] sm:$0xff]
        %v315 = vld [vmem:[%s246 + $0x78] sm:$0xff]
        %v316 = vld [vmem:[%s246 + $0x80] sm:$0xff]
        %v317 = vld [vmem:[%s246 + $0x88] sm:$0xff]
        %v318 = vpack.c.bf16 %v302, %v300
        %v319 = vpack.c.bf16 %v303, %v301
        %v320 = vpack.c.bf16 %v306, %v304
        %v321 = vpack.c.bf16 %v307, %v305
        %v322 = vpack.c.bf16 %v310, %v308
        %v323 = vpack.c.bf16 %v311, %v309
        %v324 = vpack.c.bf16 %v314, %v312
        %v325 = vpack.c.bf16 %v315, %v313
        %v326 = vpack.c.bf16 %v316, %v316
        %v327 = vpack.c.bf16 %v317, %v317
        %vm328 = vcmask 588800
        %v330 = vsel %vm328, %v299, 0
        %vm332 = vcmask 1043456
        %v334 = vsel %vm332, %v326, 0
        %v337 = vsel %vm332, %v327, 0
        %339 = vmatprep.subr.bf16.mxu0 0
        %340 = vmatpush1.bf16.msra.mxu0 0
        %341 = vmatprep.subr.bf16.mxu0 0
        %342 = vmatpush1.bf16.msra.mxu0 0
        %343 = vmatprep.subr.bf16.mxu0 0
        %344 = vmatpush1.bf16.msra.mxu0 0
        %345 = vmatprep.subr.bf16.mxu0 %v337
        %346 = vmatpush1.bf16.msra.mxu0 %v334
        %347 = vmatprep.subr.bf16.mxu0 %v325
        %348 = vmatpush1.bf16.msra.mxu0 %v324
        %349 = vmatprep.subr.bf16.mxu0 %v323
        %350 = vmatpush1.bf16.msra.mxu0 %v322
        %351 = vmatprep.subr.bf16.mxu0 %v321
        %352 = vmatpush1.bf16.msra.mxu0 %v320
        %353 = vmatprep.subr.bf16.mxu0 %v319
        %354 = vmatpush1.bf16.msra.mxu0 %v318
        %355 = vmatprep.subr.bf16.mxu0 0
        %356 = vmatpush2.bf16.msra.mxu0 0
        %357 = vmatprep.subr.bf16.mxu0 0
        %358 = vmatpush2.bf16.msra.mxu0 0
        %359 = vmatprep.subr.bf16.mxu0 0
        %360 = vmatpush2.bf16.msra.mxu0 0
        %361 = vmatprep.subr.bf16.mxu0 0
        %362 = vmatpush2.bf16.msra.mxu0 0
        %363 = vmatprep.subr.bf16.mxu0 0
        %364 = vmatpush2.bf16.msra.mxu0 0
        %365 = vmatprep.subr.bf16.mxu0 0
        %366 = vmatpush2.bf16.msra.mxu0 0
        %367 = vmatprep.subr.bf16.mxu0 0
        %368 = vmatpush2.bf16.msra.mxu0 0
        %369 = vmatprep.subr.bf16.mxu0 0
        %370 = vmatpush2.bf16.msra.mxu0 0
        %371 = vmatprep.mubr.bf16.mxu0 0
        %372 = vmatmul.mubr.bf16.gmra.mxu0 %v330
        %v373 = vpop.f32.mrf.mxu0
        %v374 = vadd.f32 0.0, %v373
        %v375 = vpop.f32.mrf.mxu0
        %v376 = vadd.f32 0.0, %v375
        %v377 = vpop.f32.mrf.mxu0
        %v378 = vpop.f32.mrf.mxu0
        %379 = vdwg.mxu0
        %v380 = vld [vmem:[%s290] sm:$0xff]
        %v381 = vld [vmem:[%s290 + $0x8] sm:$0xff]
        %v382 = vld [vmem:[%s284] sm:$0xff]
        %v383 = vld [vmem:[%s284 + $0x8] sm:$0xff]
        %v384 = vadd.f32 %v380, %v382
        %v385 = vadd.f32 %v381, %v383
        %v386 = vadd.f32 %v384, %v374
        %v387 = vadd.f32 %v385, %v376
        %388 = vst [vmem:[%s296] sm:$0xff] %v386
        %389 = vst [vmem:[%s296 + $0x8] sm:$0xff] %v387
        %s390 = smul.u32 2, %s15
        %p391 = scmp.lt.s32.totalorder %s390, 3
        %s392 = scalar_select %p391, %s390, 3
        %s393 = smul.addr %s392, 8
        %s394 = scalar_lea.vmem %s4, %s393
        // Predicated region
        $region60: #{rotation_net_forward.10} parent=54 // pred_check
          %p395 = pneg %p132
        $region61: #{rotation_net_forward.10} parent=54 // pred_check_branch
          %397 = sbr.rel (%p395) target = $region63
        $region62: #{rotation_net_forward.10} parent=54 // pred_region
          %s398 = smul.u32 2, %s15
        $region63: #{rotation_net_forward.10} parent=54 // pred_fallthru
          _
      $region55: #{rotation_net_forward.10} parent=5 // pred_fallthru
        _
      %p399 = scmp.le.s32.totalorder 2, %s10
      // Predicated region
      $region64: #{rotation_net_forward.10} parent=5 // pred_check
        %p400 = pneg %p399
      $region65: #{rotation_net_forward.10} parent=5 // pred_check_branch
        %402 = sbr.rel (%p400) target = $region67
      $region66: #{rotation_net_forward.10} parent=5 // pred_region
        %s403 = ssub.s32 %s10, 2
        // Predicated region
        $region68: #{rotation_net_forward.10} parent=66 // pred_check
          %p404 = pneg %p138
        $region69: #{rotation_net_forward.10} parent=66 // pred_check_branch
          %406 = sbr.rel (%p404) target = $region71
        $region70: #{rotation_net_forward.10} parent=66 // pred_region
          %s407 = smul.u32 2, %s16
          %p408 = scmp.lt.s32.totalorder %s407, 3
          %s409 = scalar_select %p408, %s407, 3
          %s410 = smul.addr %s409, 8
          %s411 = scalar_lea.vmem %s4, %s410
        $region71: #{rotation_net_forward.10} parent=66 // pred_fallthru
          _
      $region67: #{rotation_net_forward.10} parent=5 // pred_fallthru
        _
    $region6: #{rotation_net_forward.10} parent=1 // loop_footer
      %s14 = sadd.s32 1, %s10
    $region7: #{rotation_net_forward.10} parent=1 // loop_footer_branch
      %9 = sbr.rel target = $region3
    $region8: #{rotation_net_forward.10} parent=1 // loop_exit
      _

</llo_original>
